<compile_context>
chip_gen: v7x
topology: tpu7x:2x2x1
jax: 0.10.0
libtpu: 0.0.40
codegen_flags: <defaults>
</compile_context>

<pallas_src>
import functools

import jax
import jax.numpy as jnp
from jax.experimental import pallas as pl
from jax.experimental.pallas import tpu as pltpu


# ----------------------------- Pallas kernel ------------------------------ #
def _up_double_conv_kernel(x2p_ref, x1_ref, up_ref, w1_ref, b1_ref,
                           w2_ref, b2_ref, mask_ref, o_ref, *, wpad):
    """Fused Up forward for one image, channels-first flat layout.

    x2p_ref : (1, C2, LPAD)   bf16  skip input, spatially zero-padded, flattened
    x1_ref  : (1, C1, H1*W1)  f32   low-res input, flattened
    up_ref  : (H1*W1, LPAD)   f32   bilinear-upsample matrix -> padded flat layout
    w1_ref  : (9, CM, C2+C1)  bf16  conv1 per-tap weights (BN scale folded)
    b1_ref  : (CM, 1)         f32   folded BN shift, layer 1
    w2_ref  : (9, CO, CM)     bf16  conv2 per-tap weights (BN scale folded)
    b2_ref  : (CO, 1)         f32   folded BN shift, layer 2
    mask_ref: (1, LOUT)       f32   1.0 on valid output columns (w < W)
    o_ref   : (1, CO, LOUT)   bf16  output, channels-first flat (cols w < W valid)
    """
    cm = b1_ref.shape[0]
    co = o_ref.shape[1]
    lout = o_ref.shape[2]
    lpad = x2p_ref.shape[2]

    # --- bilinear x2 upsample (align_corners=True) as one MXU matmul; the
    #     result lands directly in the spatially zero-padded flat layout. ---
    x1up = jnp.dot(x1_ref[0], up_ref[...],
                   preferred_element_type=jnp.float32).astype(jnp.bfloat16)

    # --- channel concat: torch.cat([x2, x1_up], dim=1) == sublane concat ---
    xcat = jnp.concatenate([x2p_ref[0], x1up], axis=0)        # (C2+C1, LPAD)

    # --- conv1: 9 per-tap dots, spatial on MXU lanes, f32 accumulation ---
    acc1 = jnp.zeros((cm, lout), jnp.float32)
    for kh in range(3):
        for kw in range(3):
            t = kh * 3 + kw
            off = kh * wpad + kw
            acc1 += jnp.dot(w1_ref[t], xcat[:, off:off + lout],
                            preferred_element_type=jnp.float32)
    # Folded-BN shift + ReLU; mask zeroes the 2 invalid columns per row so
    # they become the left/right spatial zero-padding for conv2.
    y1 = (jnp.maximum(acc1 + b1_ref[...], 0.0) * mask_ref[...]).astype(jnp.bfloat16)

    # Re-pad to the flattened (H+2, W+2) layout entirely in registers
    # (no scratch buffer, no full-buffer zeroing, no HBM round trip).
    lead = wpad + 1                                            # = W + 3
    zl = jnp.zeros((cm, lead), jnp.bfloat16)
    zr = jnp.zeros((cm, lpad - lout - lead), jnp.bfloat16)
    mid = jnp.concatenate([zl, y1, zr], axis=1)                # (CM, LPAD)

    # --- conv2: same per-tap accumulation on the in-register intermediate ---
    acc2 = jnp.zeros((co, lout), jnp.float32)
    for kh in range(3):
        for kw in range(3):
            t = kh * 3 + kw
            off = kh * wpad + kw
            acc2 += jnp.dot(w2_ref[t], mid[:, off:off + lout],
                            preferred_element_type=jnp.float32)
    o_ref[0] = jnp.maximum(acc2 + b2_ref[...], 0.0).astype(o_ref.dtype)


# ------------------------------ param prep --------------------------------- #
def _per_tap(w_oihw):
    """OIHW 3x3 weight -> (9, O, I) per-tap slab, tap index t = kh*3 + kw."""
    o, i, _, _ = w_oihw.shape
    return jnp.transpose(w_oihw, (2, 3, 0, 1)).reshape(9, o, i).astype(jnp.bfloat16)


def prepare_up_params(w1_oihw, bias1, gamma1, beta1, mean1, var1,
                      w2_oihw, bias2, gamma2, beta2, mean2, var2, eps=1e-5):
    """Fold eval-mode BatchNorm (scale into weights, shift kept) for both convs."""
    s1 = gamma1 / jnp.sqrt(var1 + eps)
    b1 = beta1 + (bias1 - mean1) * s1
    s2 = gamma2 / jnp.sqrt(var2 + eps)
    b2 = beta2 + (bias2 - mean2) * s2
    w1_eff = w1_oihw * s1[:, None, None, None]
    w2_eff = w2_oihw * s2[:, None, None, None]
    return {
        "w1": _per_tap(w1_eff),                       # (9, CM, C2+C1)
        "b1": b1.reshape(-1, 1).astype(jnp.float32),  # (CM, 1)
        "w2": _per_tap(w2_eff),                       # (9, CO, CM)
        "b2": b2.reshape(-1, 1).astype(jnp.float32),  # (CO, 1)
    }


def _upsample_axis_matrix(n_out, n_in):
    """(n_out, n_in) 1-D bilinear resize matrix, align_corners=True."""
    denom = max(n_out - 1, 1)
    src = jnp.arange(n_out, dtype=jnp.float32) * (n_in - 1) / denom
    lo = jnp.floor(src).astype(jnp.int32)
    hi = jnp.minimum(lo + 1, n_in - 1)
    whi = src - lo.astype(jnp.float32)
    eye = jnp.eye(n_in, dtype=jnp.float32)
    return eye[lo] * (1.0 - whi)[:, None] + eye[hi] * whi[:, None]


# ------------------------------- wrapper ----------------------------------- #
def up_pallas(x1_nchw, x2_nchw, kp):
    """Up.forward(x1, x2): upsample x1 (bilinear x2, align_corners=True),
    concat [x2, x1] on channels, DoubleConv.  NCHW in, NCHW f32 out."""
    n, c1, h1, w1 = x1_nchw.shape
    n2, c2, h, w = x2_nchw.shape
    assert n == n2 and h == 2 * h1 and w == 2 * w1
    wpad = w + 2
    lp = (h + 2) * wpad
    lpad = lp + 2                     # +2 lane slack so the (2,2) tap slice fits
    lout = h * wpad

    # Bilinear-upsample matrix (align_corners=True), emitted directly into the
    # spatially zero-padded flat layout (zero columns on the 1-pixel border).
    uh = _upsample_axis_matrix(h, h1)                       # (h, h1)
    uw = _upsample_axis_matrix(w, w1)                       # (w, w1)
    kmat = jnp.einsum('oh,pw->hwop', uh, uw).reshape(h1 * w1, h, w)
    up = jnp.zeros((h1 * w1, h + 2, wpad), jnp.float32)
    up = up.at[:, 1:h + 1, 1:w + 1].set(kmat)
    up = jnp.pad(up.reshape(h1 * w1, lp), ((0, 0), (0, lpad - lp)))

    # Channels-first flat inputs (NCHW is already contiguous over H, W).
    x2p = jnp.pad(x2_nchw, ((0, 0), (0, 0), (1, 1), (1, 1)))
    x2p = jnp.pad(x2p.reshape(n, c2, lp), ((0, 0), (0, 0), (0, lpad - lp)))
    x2p = x2p.astype(jnp.bfloat16)
    x1f = x1_nchw.reshape(n, c1, h1 * w1).astype(jnp.float32)

    # Valid-column mask (w < W) for the flattened (H, W+2) output rows.
    mask = ((jnp.arange(lout) % wpad) < w).astype(jnp.float32).reshape(1, lout)

    w1t, b1, w2t, b2 = kp["w1"], kp["b1"], kp["w2"], kp["b2"]
    cm = w1t.shape[1]
    co = w2t.shape[1]

    flops = 2 * n * (c1 * h1 * w1 * lpad          # fused upsample matmul
                     + 9 * (c1 + c2) * cm * lout  # conv1
                     + 9 * cm * co * lout)        # conv2
    bytes_accessed = (x2p.size * 2 + x1f.size * 4 + up.size * 4
                      + w1t.size * 2 + w2t.size * 2 + mask.size * 4
                      + n * co * lout * 2)

    out = pl.pallas_call(
        functools.partial(_up_double_conv_kernel, wpad=wpad),
        out_shape=jax.ShapeDtypeStruct((n, co, lout), jnp.bfloat16),
        grid_spec=pltpu.PrefetchScalarGridSpec(
            num_scalar_prefetch=0,
            grid=(n,),
            in_specs=[
                pl.BlockSpec((1, c2, lpad), lambda i: (i, 0, 0)),
                pl.BlockSpec((1, c1, h1 * w1), lambda i: (i, 0, 0)),
                pl.BlockSpec((h1 * w1, lpad), lambda i: (0, 0)),
                pl.BlockSpec((9, cm, c2 + c1), lambda i: (0, 0, 0)),
                pl.BlockSpec((cm, 1), lambda i: (0, 0)),
                pl.BlockSpec((9, co, cm), lambda i: (0, 0, 0)),
                pl.BlockSpec((co, 1), lambda i: (0, 0)),
                pl.BlockSpec((1, lout), lambda i: (0, 0)),
            ],
            out_specs=pl.BlockSpec((1, co, lout), lambda i: (i, 0, 0)),
        ),
        compiler_params=pltpu.CompilerParams(
            dimension_semantics=("parallel",)),
        cost_estimate=pl.CostEstimate(flops=flops, transcendentals=0,
                                      bytes_accessed=bytes_accessed),
    )(x2p, x1f, up, w1t, b1, w2t, b2, mask)

    # Drop the 2 invalid columns per row; result is already NCHW.
    return out.reshape(n, co, h, wpad)[..., :w].astype(jnp.float32)


# ------------------------- pure-JAX reference ------------------------------ #
def _ref_bilinear_up2_nchw(x):
    n, c, hh, ww = x.shape
    ho, wo = 2 * hh, 2 * ww
    ys = jnp.arange(ho, dtype=jnp.float32) * (hh - 1) / max(ho - 1, 1)
    xs = jnp.arange(wo, dtype=jnp.float32) * (ww - 1) / max(wo - 1, 1)
    y0 = jnp.floor(ys).astype(jnp.int32)
    y1 = jnp.minimum(y0 + 1, hh - 1)
    x0 = jnp.floor(xs).astype(jnp.int32)
    x1i = jnp.minimum(x0 + 1, ww - 1)
    wy = (ys - y0.astype(jnp.float32))[None, None, :, None]
    wx = (xs - x0.astype(jnp.float32))[None, None, None, :]
    top, bot = x[:, :, y0, :], x[:, :, y1, :]
    rows = top + (bot - top) * wy
    left, right = rows[:, :, :, x0], rows[:, :, :, x1i]
    return left + (right - left) * wx


def _ref_conv_bn_relu(x, w_oihw, bias, gamma, beta, mean, var, eps=1e-5):
    y = jax.lax.conv_general_dilated(
        x.astype(jnp.bfloat16), w_oihw.astype(jnp.bfloat16), (1, 1), 'SAME',
        dimension_numbers=('NCHW', 'OIHW', 'NCHW'),
        preferred_element_type=jnp.float32)
    y = y + bias[None, :, None, None]
    y = ((y - mean[None, :, None, None])
         / jnp.sqrt(var[None, :, None, None] + eps)
         * gamma[None, :, None, None] + beta[None, :, None, None])
    return jnp.maximum(y, 0.0)


def _ref_up_forward(x1, x2, p):
    x = jnp.concatenate([x2, _ref_bilinear_up2_nchw(x1)], axis=1)
    y = _ref_conv_bn_relu(x, p["w1"], p["bias1"], p["gamma1"], p["beta1"],
                          p["mean1"], p["var1"])
    return _ref_conv_bn_relu(y, p["w2"], p["bias2"], p["gamma2"], p["beta2"],
                             p["mean2"], p["var2"])


# --------------------------------- main ------------------------------------ #
if __name__ == "__main__":
    key = jax.random.PRNGKey(0)
    ks = jax.random.split(key, 14)

    # Up(in_channels=4, out_channels=8, before_channel=4, bilinear=True)
    in_channels, out_channels, before_channel = 4, 8, 4
    N, H1, W1 = 2, 8, 8                 # x1: low-res feature map
    H2, W2 = 2 * H1, 2 * W1             # x2: skip connection (2x spatial)
    cin_total = in_channels + before_channel

    x1 = jax.random.normal(ks[0], (N, in_channels, H1, W1), jnp.float32)
    x2 = jax.random.normal(ks[1], (N, before_channel, H2, W2), jnp.float32)

    # DoubleConv(cin_total, out_channels) raw parameters (channel order of the
    # Conv2d input dim is [x2 channels, x1 channels], matching torch.cat).
    w1_oihw = 0.1 * jax.random.normal(ks[2], (out_channels, cin_total, 3, 3), jnp.float32)
    bias1   = 0.1 * jax.random.normal(ks[3], (out_channels,), jnp.float32)
    gamma1  = 1.0 + 0.1 * jax.random.normal(ks[4], (out_channels,), jnp.float32)
    beta1   = 0.1 * jax.random.normal(ks[5], (out_channels,), jnp.float32)
    mean1   = 0.1 * jax.random.normal(ks[6], (out_channels,), jnp.float32)
    var1    = jax.random.uniform(ks[7], (out_channels,), jnp.float32, 0.5, 1.5)

    w2_oihw = 0.1 * jax.random.normal(ks[8], (out_channels, out_channels, 3, 3), jnp.float32)
    bias2   = 0.1 * jax.random.normal(ks[9], (out_channels,), jnp.float32)
    gamma2  = 1.0 + 0.1 * jax.random.normal(ks[10], (out_channels,), jnp.float32)
    beta2   = 0.1 * jax.random.normal(ks[11], (out_channels,), jnp.float32)
    mean2   = 0.1 * jax.random.normal(ks[12], (out_channels,), jnp.float32)
    var2    = jax.random.uniform(ks[13], (out_channels,), jnp.float32, 0.5, 1.5)

    kernel_params = prepare_up_params(w1_oihw, bias1, gamma1, beta1, mean1, var1,
                                      w2_oihw, bias2, gamma2, beta2, mean2, var2)

    up = jax.jit(up_pallas)
    out = jax.block_until_ready(up(x1, x2, kernel_params))
    assert out.shape == (N, out_channels, H2, W2), out.shape

    # Validate the fused Pallas path against the straightforward JAX reference
    # (upsample -> concat -> conv+bias -> eval BN -> ReLU, twice).
    ref = _ref_up_forward(x1, x2, {
        "w1": w1_oihw, "bias1": bias1, "gamma1": gamma1, "beta1": beta1,
        "mean1": mean1, "var1": var1,
        "w2": w2_oihw, "bias2": bias2, "gamma2": gamma2, "beta2": beta2,
        "mean2": mean2, "var2": var2})
    err = float(jnp.max(jnp.abs(out - ref)))
    assert jnp.allclose(out, ref, rtol=2e-2, atol=2e-2), err

    print("KERNEL_OK")
</pallas_src>

<mosaic_0001>
module attributes {stable_mosaic.version = 11 : i64} {
  func.func @_up_double_conv_kernel(%arg0: i32, %arg1: memref<1x4x326xbf16, #tpu.memory_space<vmem>>, %arg2: memref<1x4x64xf32, #tpu.memory_space<vmem>>, %arg3: memref<64x326xf32, #tpu.memory_space<vmem>>, %arg4: memref<9x8x8xbf16, #tpu.memory_space<vmem>>, %arg5: memref<8x1xf32, #tpu.memory_space<vmem>>, %arg6: memref<9x8x8xbf16, #tpu.memory_space<vmem>>, %arg7: memref<8x1xf32, #tpu.memory_space<vmem>>, %arg8: memref<1x288xf32, #tpu.memory_space<vmem>>, %arg9: memref<1x8x288xbf16, #tpu.memory_space<vmem>>) attributes {dimension_semantics = [#tpu.dimension_semantics<parallel>], iteration_bounds = array<i64: 2>, scalar_prefetch = 0 : i64, scratch_operands = 0 : i64, tpu.core_type = #tpu.core_type<tc>, window_params = [{transform_indices = @transform_0, window_bounds = array<i64: 1, 4, 326>}, {transform_indices = @transform_1, window_bounds = array<i64: 1, 4, 64>}, {pipeline_mode = #tpu.pipeline_mode<synchronous>, transform_indices = @transform_2, window_bounds = array<i64: 64, 326>}, {pipeline_mode = #tpu.pipeline_mode<synchronous>, transform_indices = @transform_3, window_bounds = array<i64: 9, 8, 8>}, {pipeline_mode = #tpu.pipeline_mode<synchronous>, transform_indices = @transform_4, window_bounds = array<i64: 8, 1>}, {pipeline_mode = #tpu.pipeline_mode<synchronous>, transform_indices = @transform_5, window_bounds = array<i64: 9, 8, 8>}, {pipeline_mode = #tpu.pipeline_mode<synchronous>, transform_indices = @transform_6, window_bounds = array<i64: 8, 1>}, {pipeline_mode = #tpu.pipeline_mode<synchronous>, transform_indices = @transform_7, window_bounds = array<i64: 1, 288>}, {transform_indices = @transform_8, window_bounds = array<i64: 1, 8, 288>}]} {
    %c0 = arith.constant 0 : index
    %c0_0 = arith.constant 0 : index
    %c0_1 = arith.constant 0 : index
    %0 = vector.load %arg2[%c0, %c0_0, %c0_1] : memref<1x4x64xf32, #tpu.memory_space<vmem>>, vector<1x4x64xf32>
    %1 = vector.shape_cast %0 : vector<1x4x64xf32> to vector<4x64xf32>
    %c0_2 = arith.constant 0 : index
    %c0_3 = arith.constant 0 : index
    %2 = vector.load %arg3[%c0_2, %c0_3] : memref<64x326xf32, #tpu.memory_space<vmem>>, vector<64x326xf32>
    %cst = arith.constant dense<0.000000e+00> : vector<4x326xf32>
    %3 = tpu.matmul %1, %2, %cst {dimension_numbers = #tpu.dot_dimension_numbers<[1], [0], [0], [1], [0, 0, 1, 1], [], []>} : vector<4x64xf32>, vector<64x326xf32>, vector<4x326xf32> -> vector<4x326xf32>
    %4 = arith.truncf %3 : vector<4x326xf32> to vector<4x326xbf16>
    %c0_4 = arith.constant 0 : index
    %c0_5 = arith.constant 0 : index
    %c0_6 = arith.constant 0 : index
    %5 = vector.load %arg1[%c0_4, %c0_5, %c0_6] : memref<1x4x326xbf16, #tpu.memory_space<vmem>>, vector<1x4x326xbf16>
    %6 = vector.shape_cast %5 : vector<1x4x326xbf16> to vector<4x326xbf16>
    %7 = tpu.concatenate %6, %4 in 0 : vector<4x326xbf16>, vector<4x326xbf16> -> vector<8x326xbf16>
    %cst_7 = arith.constant 0.000000e+00 : f32
    %8 = vector.broadcast %cst_7 : f32 to vector<8x288xf32>
    %c0_8 = arith.constant 0 : index
    %c0_9 = arith.constant 0 : index
    %c0_10 = arith.constant 0 : index
    %9 = vector.load %arg4[%c0_8, %c0_9, %c0_10] : memref<9x8x8xbf16, #tpu.memory_space<vmem>>, vector<1x8x8xbf16>
    %10 = vector.shape_cast %9 : vector<1x8x8xbf16> to vector<8x8xbf16>
    %11 = vector.extract_strided_slice %7 {offsets = [0, 0], sizes = [8, 288], strides = [1, 1]} : vector<8x326xbf16> to vector<8x288xbf16>
    %cst_11 = arith.constant dense<0.000000e+00> : vector<8x288xf32>
    %12 = tpu.matmul %10, %11, %cst_11 {dimension_numbers = #tpu.dot_dimension_numbers<[1], [0], [0], [1], [0, 0, 1, 1], [], []>} : vector<8x8xbf16>, vector<8x288xbf16>, vector<8x288xf32> -> vector<8x288xf32>
    %13 = arith.addf %8, %12 : vector<8x288xf32>
    %c1 = arith.constant 1 : index
    %c0_12 = arith.constant 0 : index
    %c0_13 = arith.constant 0 : index
    %14 = vector.load %arg4[%c1, %c0_12, %c0_13] : memref<9x8x8xbf16, #tpu.memory_space<vmem>>, vector<1x8x8xbf16>
    %15 = vector.shape_cast %14 : vector<1x8x8xbf16> to vector<8x8xbf16>
    %16 = vector.extract_strided_slice %7 {offsets = [0, 1], sizes = [8, 288], strides = [1, 1]} : vector<8x326xbf16> to vector<8x288xbf16>
    %cst_14 = arith.constant dense<0.000000e+00> : vector<8x288xf32>
    %17 = tpu.matmul %15, %16, %cst_14 {dimension_numbers = #tpu.dot_dimension_numbers<[1], [0], [0], [1], [0, 0, 1, 1], [], []>} : vector<8x8xbf16>, vector<8x288xbf16>, vector<8x288xf32> -> vector<8x288xf32>
    %18 = arith.addf %13, %17 : vector<8x288xf32>
    %c2 = arith.constant 2 : index
    %c0_15 = arith.constant 0 : index
    %c0_16 = arith.constant 0 : index
    %19 = vector.load %arg4[%c2, %c0_15, %c0_16] : memref<9x8x8xbf16, #tpu.memory_space<vmem>>, vector<1x8x8xbf16>
    %20 = vector.shape_cast %19 : vector<1x8x8xbf16> to vector<8x8xbf16>
    %21 = vector.extract_strided_slice %7 {offsets = [0, 2], sizes = [8, 288], strides = [1, 1]} : vector<8x326xbf16> to vector<8x288xbf16>
    %cst_17 = arith.constant dense<0.000000e+00> : vector<8x288xf32>
    %22 = tpu.matmul %20, %21, %cst_17 {dimension_numbers = #tpu.dot_dimension_numbers<[1], [0], [0], [1], [0, 0, 1, 1], [], []>} : vector<8x8xbf16>, vector<8x288xbf16>, vector<8x288xf32> -> vector<8x288xf32>
    %23 = arith.addf %18, %22 : vector<8x288xf32>
    %c3 = arith.constant 3 : index
    %c0_18 = arith.constant 0 : index
    %c0_19 = arith.constant 0 : index
    %24 = vector.load %arg4[%c3, %c0_18, %c0_19] : memref<9x8x8xbf16, #tpu.memory_space<vmem>>, vector<1x8x8xbf16>
    %25 = vector.shape_cast %24 : vector<1x8x8xbf16> to vector<8x8xbf16>
    %26 = vector.extract_strided_slice %7 {offsets = [0, 18], sizes = [8, 288], strides = [1, 1]} : vector<8x326xbf16> to vector<8x288xbf16>
    %cst_20 = arith.constant dense<0.000000e+00> : vector<8x288xf32>
    %27 = tpu.matmul %25, %26, %cst_20 {dimension_numbers = #tpu.dot_dimension_numbers<[1], [0], [0], [1], [0, 0, 1, 1], [], []>} : vector<8x8xbf16>, vector<8x288xbf16>, vector<8x288xf32> -> vector<8x288xf32>
    %28 = arith.addf %23, %27 : vector<8x288xf32>
    %c4 = arith.constant 4 : index
    %c0_21 = arith.constant 0 : index
    %c0_22 = arith.constant 0 : index
    %29 = vector.load %arg4[%c4, %c0_21, %c0_22] : memref<9x8x8xbf16, #tpu.memory_space<vmem>>, vector<1x8x8xbf16>
    %30 = vector.shape_cast %29 : vector<1x8x8xbf16> to vector<8x8xbf16>
    %31 = vector.extract_strided_slice %7 {offsets = [0, 19], sizes = [8, 288], strides = [1, 1]} : vector<8x326xbf16> to vector<8x288xbf16>
    %cst_23 = arith.constant dense<0.000000e+00> : vector<8x288xf32>
    %32 = tpu.matmul %30, %31, %cst_23 {dimension_numbers = #tpu.dot_dimension_numbers<[1], [0], [0], [1], [0, 0, 1, 1], [], []>} : vector<8x8xbf16>, vector<8x288xbf16>, vector<8x288xf32> -> vector<8x288xf32>
    %33 = arith.addf %28, %32 : vector<8x288xf32>
    %c5 = arith.constant 5 : index
    %c0_24 = arith.constant 0 : index
    %c0_25 = arith.constant 0 : index
    %34 = vector.load %arg4[%c5, %c0_24, %c0_25] : memref<9x8x8xbf16, #tpu.memory_space<vmem>>, vector<1x8x8xbf16>
    %35 = vector.shape_cast %34 : vector<1x8x8xbf16> to vector<8x8xbf16>
    %36 = vector.extract_strided_slice %7 {offsets = [0, 20], sizes = [8, 288], strides = [1, 1]} : vector<8x326xbf16> to vector<8x288xbf16>
    %cst_26 = arith.constant dense<0.000000e+00> : vector<8x288xf32>
    %37 = tpu.matmul %35, %36, %cst_26 {dimension_numbers = #tpu.dot_dimension_numbers<[1], [0], [0], [1], [0, 0, 1, 1], [], []>} : vector<8x8xbf16>, vector<8x288xbf16>, vector<8x288xf32> -> vector<8x288xf32>
    %38 = arith.addf %33, %37 : vector<8x288xf32>
    %c6 = arith.constant 6 : index
    %c0_27 = arith.constant 0 : index
    %c0_28 = arith.constant 0 : index
    %39 = vector.load %arg4[%c6, %c0_27, %c0_28] : memref<9x8x8xbf16, #tpu.memory_space<vmem>>, vector<1x8x8xbf16>
    %40 = vector.shape_cast %39 : vector<1x8x8xbf16> to vector<8x8xbf16>
    %41 = vector.extract_strided_slice %7 {offsets = [0, 36], sizes = [8, 288], strides = [1, 1]} : vector<8x326xbf16> to vector<8x288xbf16>
    %cst_29 = arith.constant dense<0.000000e+00> : vector<8x288xf32>
    %42 = tpu.matmul %40, %41, %cst_29 {dimension_numbers = #tpu.dot_dimension_numbers<[1], [0], [0], [1], [0, 0, 1, 1], [], []>} : vector<8x8xbf16>, vector<8x288xbf16>, vector<8x288xf32> -> vector<8x288xf32>
    %43 = arith.addf %38, %42 : vector<8x288xf32>
    %c7 = arith.constant 7 : index
    %c0_30 = arith.constant 0 : index
    %c0_31 = arith.constant 0 : index
    %44 = vector.load %arg4[%c7, %c0_30, %c0_31] : memref<9x8x8xbf16, #tpu.memory_space<vmem>>, vector<1x8x8xbf16>
    %45 = vector.shape_cast %44 : vector<1x8x8xbf16> to vector<8x8xbf16>
    %46 = vector.extract_strided_slice %7 {offsets = [0, 37], sizes = [8, 288], strides = [1, 1]} : vector<8x326xbf16> to vector<8x288xbf16>
    %cst_32 = arith.constant dense<0.000000e+00> : vector<8x288xf32>
    %47 = tpu.matmul %45, %46, %cst_32 {dimension_numbers = #tpu.dot_dimension_numbers<[1], [0], [0], [1], [0, 0, 1, 1], [], []>} : vector<8x8xbf16>, vector<8x288xbf16>, vector<8x288xf32> -> vector<8x288xf32>
    %48 = arith.addf %43, %47 : vector<8x288xf32>
    %c8 = arith.constant 8 : index
    %c0_33 = arith.constant 0 : index
    %c0_34 = arith.constant 0 : index
    %49 = vector.load %arg4[%c8, %c0_33, %c0_34] : memref<9x8x8xbf16, #tpu.memory_space<vmem>>, vector<1x8x8xbf16>
    %50 = vector.shape_cast %49 : vector<1x8x8xbf16> to vector<8x8xbf16>
    %51 = vector.extract_strided_slice %7 {offsets = [0, 38], sizes = [8, 288], strides = [1, 1]} : vector<8x326xbf16> to vector<8x288xbf16>
    %cst_35 = arith.constant dense<0.000000e+00> : vector<8x288xf32>
    %52 = tpu.matmul %50, %51, %cst_35 {dimension_numbers = #tpu.dot_dimension_numbers<[1], [0], [0], [1], [0, 0, 1, 1], [], []>} : vector<8x8xbf16>, vector<8x288xbf16>, vector<8x288xf32> -> vector<8x288xf32>
    %53 = arith.addf %48, %52 : vector<8x288xf32>
    %c0_36 = arith.constant 0 : index
    %c0_37 = arith.constant 0 : index
    %54 = vector.load %arg5[%c0_36, %c0_37] : memref<8x1xf32, #tpu.memory_space<vmem>>, vector<8x1xf32>
    %55 = vector.broadcast %54 : vector<8x1xf32> to vector<8x288xf32>
    %56 = arith.addf %53, %55 : vector<8x288xf32>
    %cst_38 = arith.constant 0.000000e+00 : f32
    %57 = vector.broadcast %cst_38 : f32 to vector<8x288xf32>
    %58 = arith.maximumf %56, %57 : vector<8x288xf32>
    %c0_39 = arith.constant 0 : index
    %c0_40 = arith.constant 0 : index
    %59 = vector.load %arg8[%c0_39, %c0_40] : memref<1x288xf32, #tpu.memory_space<vmem>>, vector<1x288xf32>
    %60 = vector.broadcast %59 : vector<1x288xf32> to vector<8x288xf32>
    %61 = arith.mulf %58, %60 : vector<8x288xf32>
    %62 = arith.truncf %61 : vector<8x288xf32> to vector<8x288xbf16>
    %cst_41 = arith.constant 0.000000e+00 : bf16
    %63 = vector.broadcast %cst_41 : bf16 to vector<8x19xbf16>
    %cst_42 = arith.constant 0.000000e+00 : bf16
    %64 = vector.broadcast %cst_42 : bf16 to vector<8x19xbf16>
    %65 = tpu.concatenate %63, %62, %64 in 1 : vector<8x19xbf16>, vector<8x288xbf16>, vector<8x19xbf16> -> vector<8x326xbf16>
    %cst_43 = arith.constant 0.000000e+00 : f32
    %66 = vector.broadcast %cst_43 : f32 to vector<8x288xf32>
    %c0_44 = arith.constant 0 : index
    %c0_45 = arith.constant 0 : index
    %c0_46 = arith.constant 0 : index
    %67 = vector.load %arg6[%c0_44, %c0_45, %c0_46] : memref<9x8x8xbf16, #tpu.memory_space<vmem>>, vector<1x8x8xbf16>
    %68 = vector.shape_cast %67 : vector<1x8x8xbf16> to vector<8x8xbf16>
    %69 = vector.extract_strided_slice %65 {offsets = [0, 0], sizes = [8, 288], strides = [1, 1]} : vector<8x326xbf16> to vector<8x288xbf16>
    %cst_47 = arith.constant dense<0.000000e+00> : vector<8x288xf32>
    %70 = tpu.matmul %68, %69, %cst_47 {dimension_numbers = #tpu.dot_dimension_numbers<[1], [0], [0], [1], [0, 0, 1, 1], [], []>} : vector<8x8xbf16>, vector<8x288xbf16>, vector<8x288xf32> -> vector<8x288xf32>
    %71 = arith.addf %66, %70 : vector<8x288xf32>
    %c1_48 = arith.constant 1 : index
    %c0_49 = arith.constant 0 : index
    %c0_50 = arith.constant 0 : index
    %72 = vector.load %arg6[%c1_48, %c0_49, %c0_50] : memref<9x8x8xbf16, #tpu.memory_space<vmem>>, vector<1x8x8xbf16>
    %73 = vector.shape_cast %72 : vector<1x8x8xbf16> to vector<8x8xbf16>
    %74 = vector.extract_strided_slice %65 {offsets = [0, 1], sizes = [8, 288], strides = [1, 1]} : vector<8x326xbf16> to vector<8x288xbf16>
    %cst_51 = arith.constant dense<0.000000e+00> : vector<8x288xf32>
    %75 = tpu.matmul %73, %74, %cst_51 {dimension_numbers = #tpu.dot_dimension_numbers<[1], [0], [0], [1], [0, 0, 1, 1], [], []>} : vector<8x8xbf16>, vector<8x288xbf16>, vector<8x288xf32> -> vector<8x288xf32>
    %76 = arith.addf %71, %75 : vector<8x288xf32>
    %c2_52 = arith.constant 2 : index
    %c0_53 = arith.constant 0 : index
    %c0_54 = arith.constant 0 : index
    %77 = vector.load %arg6[%c2_52, %c0_53, %c0_54] : memref<9x8x8xbf16, #tpu.memory_space<vmem>>, vector<1x8x8xbf16>
    %78 = vector.shape_cast %77 : vector<1x8x8xbf16> to vector<8x8xbf16>
    %79 = vector.extract_strided_slice %65 {offsets = [0, 2], sizes = [8, 288], strides = [1, 1]} : vector<8x326xbf16> to vector<8x288xbf16>
    %cst_55 = arith.constant dense<0.000000e+00> : vector<8x288xf32>
    %80 = tpu.matmul %78, %79, %cst_55 {dimension_numbers = #tpu.dot_dimension_numbers<[1], [0], [0], [1], [0, 0, 1, 1], [], []>} : vector<8x8xbf16>, vector<8x288xbf16>, vector<8x288xf32> -> vector<8x288xf32>
    %81 = arith.addf %76, %80 : vector<8x288xf32>
    %c3_56 = arith.constant 3 : index
    %c0_57 = arith.constant 0 : index
    %c0_58 = arith.constant 0 : index
    %82 = vector.load %arg6[%c3_56, %c0_57, %c0_58] : memref<9x8x8xbf16, #tpu.memory_space<vmem>>, vector<1x8x8xbf16>
    %83 = vector.shape_cast %82 : vector<1x8x8xbf16> to vector<8x8xbf16>
    %84 = vector.extract_strided_slice %65 {offsets = [0, 18], sizes = [8, 288], strides = [1, 1]} : vector<8x326xbf16> to vector<8x288xbf16>
    %cst_59 = arith.constant dense<0.000000e+00> : vector<8x288xf32>
    %85 = tpu.matmul %83, %84, %cst_59 {dimension_numbers = #tpu.dot_dimension_numbers<[1], [0], [0], [1], [0, 0, 1, 1], [], []>} : vector<8x8xbf16>, vector<8x288xbf16>, vector<8x288xf32> -> vector<8x288xf32>
    %86 = arith.addf %81, %85 : vector<8x288xf32>
    %c4_60 = arith.constant 4 : index
    %c0_61 = arith.constant 0 : index
    %c0_62 = arith.constant 0 : index
    %87 = vector.load %arg6[%c4_60, %c0_61, %c0_62] : memref<9x8x8xbf16, #tpu.memory_space<vmem>>, vector<1x8x8xbf16>
    %88 = vector.shape_cast %87 : vector<1x8x8xbf16> to vector<8x8xbf16>
    %89 = vector.extract_strided_slice %65 {offsets = [0, 19], sizes = [8, 288], strides = [1, 1]} : vector<8x326xbf16> to vector<8x288xbf16>
    %cst_63 = arith.constant dense<0.000000e+00> : vector<8x288xf32>
    %90 = tpu.matmul %88, %89, %cst_63 {dimension_numbers = #tpu.dot_dimension_numbers<[1], [0], [0], [1], [0, 0, 1, 1], [], []>} : vector<8x8xbf16>, vector<8x288xbf16>, vector<8x288xf32> -> vector<8x288xf32>
    %91 = arith.addf %86, %90 : vector<8x288xf32>
    %c5_64 = arith.constant 5 : index
    %c0_65 = arith.constant 0 : index
    %c0_66 = arith.constant 0 : index
    %92 = vector.load %arg6[%c5_64, %c0_65, %c0_66] : memref<9x8x8xbf16, #tpu.memory_space<vmem>>, vector<1x8x8xbf16>
    %93 = vector.shape_cast %92 : vector<1x8x8xbf16> to vector<8x8xbf16>
    %94 = vector.extract_strided_slice %65 {offsets = [0, 20], sizes = [8, 288], strides = [1, 1]} : vector<8x326xbf16> to vector<8x288xbf16>
    %cst_67 = arith.constant dense<0.000000e+00> : vector<8x288xf32>
    %95 = tpu.matmul %93, %94, %cst_67 {dimension_numbers = #tpu.dot_dimension_numbers<[1], [0], [0], [1], [0, 0, 1, 1], [], []>} : vector<8x8xbf16>, vector<8x288xbf16>, vector<8x288xf32> -> vector<8x288xf32>
    %96 = arith.addf %91, %95 : vector<8x288xf32>
    %c6_68 = arith.constant 6 : index
    %c0_69 = arith.constant 0 : index
    %c0_70 = arith.constant 0 : index
    %97 = vector.load %arg6[%c6_68, %c0_69, %c0_70] : memref<9x8x8xbf16, #tpu.memory_space<vmem>>, vector<1x8x8xbf16>
    %98 = vector.shape_cast %97 : vector<1x8x8xbf16> to vector<8x8xbf16>
    %99 = vector.extract_strided_slice %65 {offsets = [0, 36], sizes = [8, 288], strides = [1, 1]} : vector<8x326xbf16> to vector<8x288xbf16>
    %cst_71 = arith.constant dense<0.000000e+00> : vector<8x288xf32>
    %100 = tpu.matmul %98, %99, %cst_71 {dimension_numbers = #tpu.dot_dimension_numbers<[1], [0], [0], [1], [0, 0, 1, 1], [], []>} : vector<8x8xbf16>, vector<8x288xbf16>, vector<8x288xf32> -> vector<8x288xf32>
    %101 = arith.addf %96, %100 : vector<8x288xf32>
    %c7_72 = arith.constant 7 : index
    %c0_73 = arith.constant 0 : index
    %c0_74 = arith.constant 0 : index
    %102 = vector.load %arg6[%c7_72, %c0_73, %c0_74] : memref<9x8x8xbf16, #tpu.memory_space<vmem>>, vector<1x8x8xbf16>
    %103 = vector.shape_cast %102 : vector<1x8x8xbf16> to vector<8x8xbf16>
    %104 = vector.extract_strided_slice %65 {offsets = [0, 37], sizes = [8, 288], strides = [1, 1]} : vector<8x326xbf16> to vector<8x288xbf16>
    %cst_75 = arith.constant dense<0.000000e+00> : vector<8x288xf32>
    %105 = tpu.matmul %103, %104, %cst_75 {dimension_numbers = #tpu.dot_dimension_numbers<[1], [0], [0], [1], [0, 0, 1, 1], [], []>} : vector<8x8xbf16>, vector<8x288xbf16>, vector<8x288xf32> -> vector<8x288xf32>
    %106 = arith.addf %101, %105 : vector<8x288xf32>
    %c8_76 = arith.constant 8 : index
    %c0_77 = arith.constant 0 : index
    %c0_78 = arith.constant 0 : index
    %107 = vector.load %arg6[%c8_76, %c0_77, %c0_78] : memref<9x8x8xbf16, #tpu.memory_space<vmem>>, vector<1x8x8xbf16>
    %108 = vector.shape_cast %107 : vector<1x8x8xbf16> to vector<8x8xbf16>
    %109 = vector.extract_strided_slice %65 {offsets = [0, 38], sizes = [8, 288], strides = [1, 1]} : vector<8x326xbf16> to vector<8x288xbf16>
    %cst_79 = arith.constant dense<0.000000e+00> : vector<8x288xf32>
    %110 = tpu.matmul %108, %109, %cst_79 {dimension_numbers = #tpu.dot_dimension_numbers<[1], [0], [0], [1], [0, 0, 1, 1], [], []>} : vector<8x8xbf16>, vector<8x288xbf16>, vector<8x288xf32> -> vector<8x288xf32>
    %111 = arith.addf %106, %110 : vector<8x288xf32>
    %c0_80 = arith.constant 0 : index
    %c0_81 = arith.constant 0 : index
    %112 = vector.load %arg7[%c0_80, %c0_81] : memref<8x1xf32, #tpu.memory_space<vmem>>, vector<8x1xf32>
    %113 = vector.broadcast %112 : vector<8x1xf32> to vector<8x288xf32>
    %114 = arith.addf %111, %113 : vector<8x288xf32>
    %cst_82 = arith.constant 0.000000e+00 : f32
    %115 = vector.broadcast %cst_82 : f32 to vector<8x288xf32>
    %116 = arith.maximumf %114, %115 : vector<8x288xf32>
    %117 = arith.truncf %116 : vector<8x288xf32> to vector<8x288xbf16>
    %c0_83 = arith.constant 0 : index
    %c0_84 = arith.constant 0 : index
    %c0_85 = arith.constant 0 : index
    %118 = vector.load %arg9[%c0_83, %c0_84, %c0_85] : memref<1x8x288xbf16, #tpu.memory_space<vmem>>, vector<1x8x288xbf16>
    %119 = vector.shape_cast %118 : vector<1x8x288xbf16> to vector<8x288xbf16>
    %120 = vector.shape_cast %117 : vector<8x288xbf16> to vector<1x8x288xbf16>
    tpu.vector_store %arg9[%c0_83, %c0_84, %c0_85], %120 {strides = array<i32>} : memref<1x8x288xbf16, #tpu.memory_space<vmem>>, vector<1x8x288xbf16>,
    return
  }
  func.func @transform_0(%arg0: i32) -> (i32, i32, i32) {
    %c0_i32 = arith.constant 0 : i32
    %c0_i32_0 = arith.constant 0 : i32
    %c0_i32_1 = arith.constant 0 : i32
    return %arg0, %c0_i32, %c0_i32_0 : i32, i32, i32
  }
  func.func @transform_1(%arg0: i32) -> (i32, i32, i32) {
    %c0_i32 = arith.constant 0 : i32
    %c0_i32_0 = arith.constant 0 : i32
    %c0_i32_1 = arith.constant 0 : i32
    return %arg0, %c0_i32, %c0_i32_0 : i32, i32, i32
  }
  func.func @transform_2(%arg0: i32) -> (i32, i32) {
    %c0_i32 = arith.constant 0 : i32
    %c0_i32_0 = arith.constant 0 : i32
    %c0_i32_1 = arith.constant 0 : i32
    return %c0_i32, %c0_i32_0 : i32, i32
  }
  func.func @transform_3(%arg0: i32) -> (i32, i32, i32) {
    %c0_i32 = arith.constant 0 : i32
    %c0_i32_0 = arith.constant 0 : i32
    %c0_i32_1 = arith.constant 0 : i32
    %c0_i32_2 = arith.constant 0 : i32
    return %c0_i32, %c0_i32_0, %c0_i32_1 : i32, i32, i32
  }
  func.func @transform_4(%arg0: i32) -> (i32, i32) {
    %c0_i32 = arith.constant 0 : i32
    %c0_i32_0 = arith.constant 0 : i32
    %c0_i32_1 = arith.constant 0 : i32
    return %c0_i32, %c0_i32_0 : i32, i32
  }
  func.func @transform_5(%arg0: i32) -> (i32, i32, i32) {
    %c0_i32 = arith.constant 0 : i32
    %c0_i32_0 = arith.constant 0 : i32
    %c0_i32_1 = arith.constant 0 : i32
    %c0_i32_2 = arith.constant 0 : i32
    return %c0_i32, %c0_i32_0, %c0_i32_1 : i32, i32, i32
  }
  func.func @transform_6(%arg0: i32) -> (i32, i32) {
    %c0_i32 = arith.constant 0 : i32
    %c0_i32_0 = arith.constant 0 : i32
    %c0_i32_1 = arith.constant 0 : i32
    return %c0_i32, %c0_i32_0 : i32, i32
  }
  func.func @transform_7(%arg0: i32) -> (i32, i32) {
    %c0_i32 = arith.constant 0 : i32
    %c0_i32_0 = arith.constant 0 : i32
    %c0_i32_1 = arith.constant 0 : i32
    return %c0_i32, %c0_i32_0 : i32, i32
  }
  func.func @transform_8(%arg0: i32) -> (i32, i32, i32) {
    %c0_i32 = arith.constant 0 : i32
    %c0_i32_0 = arith.constant 0 : i32
    %c0_i32_1 = arith.constant 0 : i32
    return %arg0, %c0_i32, %c0_i32_0 : i32, i32, i32
  }
}

</mosaic_0001>

<llo_original>
// kernel: up_pallas.1
$region0: #{up_pallas.1}
  #allocation0 [shape = 'u32[]', space=smem, size = 0x4, offset = 0x4, fixed_abs, tag = 'smem constant byte address 0x4 - core index']
  #allocation1 [shape = 'u32[144,128]{1,0:T(1,128)}', space=vmem, size = 0x12000, scoped, tag = 'internal scratch']
  %s0 = inlined_call_operand.vmem [shape: bf16[2,4,326], index: 0, kind: input, shape index: {}]
  %s1 = inlined_call_operand.vmem [shape: f32[2,4,64], index: 1, kind: input, shape index: {}]
  %s2 = inlined_call_operand.vmem [shape: f32[64,326], index: 2, kind: input, shape index: {}]
  %s3 = inlined_call_operand.vmem [shape: bf16[9,8,8], index: 3, kind: input, shape index: {}]
  %s4 = inlined_call_operand.vmem [shape: f32[8,1], index: 4, kind: input, shape index: {}]
  %s5 = inlined_call_operand.vmem [shape: bf16[9,8,8], index: 5, kind: input, shape index: {}]
  %s6 = inlined_call_operand.vmem [shape: f32[8,1], index: 6, kind: input, shape index: {}]
  %s7 = inlined_call_operand.vmem [shape: f32[1,288], index: 7, kind: input, shape index: {}]
  %s8 = inlined_call_operand.vmem [shape: bf16[2,8,288], index: 8, kind: output, shape index: {}]
  %s9 = sld [smem:[#allocation0]]
  $region65: #{up_pallas.1} parent=0
    _
  %s11 = ssub.s32 1, %s9
  %s12 = scalar_select 0, %s11, %s9
  loop: start=0, step=1, limit=4
  $region2: #{up_pallas.1} parent=0 // loop_pre_header
    _
  $region3: #{up_pallas.1} parent=0 // loop_header
    %s14 = sphi 0, %s18
    %p15 = scmp.ge.s32.totalorder %s14, 4
    %s24 = sphi 0, %s26
    %s27 = sphi 0, %s24
    %s28 = sphi 0, %s27
    %s44 = sphi 0, %s28
    %s50 = sphi 0, %s52
    %s53 = sphi 0, %s50
    %s54 = sphi 0, %s53
    %s70 = sphi 0, %s54
    %s74 = sphi 0, %s74
    %s76 = sphi 0, %s74
    %s77 = sphi 0, %s76
    %s91 = sphi 0, %s77
    %s95 = sphi 0, %s95
    %s97 = sphi 0, %s95
    %s98 = sphi 0, %s97
    %s112 = sphi 0, %s98
    %s116 = sphi 0, %s116
    %s118 = sphi 0, %s116
    %s119 = sphi 0, %s118
    %s133 = sphi 0, %s119
    %s137 = sphi 0, %s137
    %s139 = sphi 0, %s137
    %s140 = sphi 0, %s139
    %s154 = sphi 0, %s140
    %s158 = sphi 0, %s158
    %s160 = sphi 0, %s158
    %s161 = sphi 0, %s160
    %s175 = sphi 0, %s161
    %s179 = sphi 0, %s179
    %s181 = sphi 0, %s179
    %s182 = sphi 0, %s181
    %s196 = sphi 0, %s182
    %s202 = sphi 0, %s204
    %s205 = sphi 0, %s202
    %s206 = sphi 0, %s205
    %s222 = sphi 0, %s206
  $region4: #{up_pallas.1} parent=0 // loop_header_branch
    %17 = sbr.rel (%p15) target = $region8
  $region5: #{up_pallas.1} parent=0 // loop_body
    %s19 = ssub.s32 %s14, 1
    %s20 = ssub.s32 %s14, 2
    %s21 = sadd.s32 %s14, 1
    %s22 = ssub.s32 %s14, %s21
    %p23 = scmp.eq.s32.totalorder %s22, 0
    %s25 = sadd.s32 %s24, 1
    %s26 = scalar_select %p23, %s24, %s25
    %p29 = pneg %p23
    %p30 = scmp.eq.s32.totalorder %s14, 1
    %p31 = por %p29, %p30
    %p32 = scmp.ne.s32.totalorder %s24, %s27
    %p33 = scmp.eq.s32.totalorder %s14, 0
    %p34 = por %p32, %p33
    %p35 = scmp.ne.s32.totalorder %s24, %s27
    %p36 = scmp.eq.s32.totalorder %s19, 1
    %p37 = por %p35, %p36
    %p38 = scmp.ne.s32.totalorder %s27, %s28
    %p39 = scmp.eq.s32.totalorder %s19, 0
    %p40 = por %p38, %p39
    %p41 = scmp.ne.s32.totalorder %s27, %s28
    %p42 = scmp.eq.s32.totalorder %s20, 1
    %p43 = por %p41, %p42
    %p45 = scmp.ne.s32.totalorder %s28, %s44
    %p46 = scmp.eq.s32.totalorder %s20, 0
    %p47 = por %p45, %p46
    %s48 = ssub.s32 %s14, %s21
    %p49 = scmp.eq.s32.totalorder %s48, 0
    %s51 = sadd.s32 %s50, 1
    %s52 = scalar_select %p49, %s50, %s51
    %p55 = pneg %p49
    %p56 = scmp.eq.s32.totalorder %s14, 1
    %p57 = por %p55, %p56
    %p58 = scmp.ne.s32.totalorder %s50, %s53
    %p59 = scmp.eq.s32.totalorder %s14, 0
    %p60 = por %p58, %p59
    %p61 = scmp.ne.s32.totalorder %s50, %s53
    %p62 = scmp.eq.s32.totalorder %s19, 1
    %p63 = por %p61, %p62
    %p64 = scmp.ne.s32.totalorder %s53, %s54
    %p65 = scmp.eq.s32.totalorder %s19, 0
    %p66 = por %p64, %p65
    %p67 = scmp.ne.s32.totalorder %s53, %s54
    %p68 = scmp.eq.s32.totalorder %s20, 1
    %p69 = por %p67, %p68
    %p71 = scmp.ne.s32.totalorder %s54, %s70
    %p72 = scmp.eq.s32.totalorder %s20, 0
    %p73 = por %p71, %p72
    %s75 = sadd.s32 %s74, 1
    %p78 = scmp.eq.s32.totalorder %s14, 1
    %p79 = scmp.ne.s32.totalorder %s74, %s76
    %p80 = scmp.eq.s32.totalorder %s14, 0
    %p81 = por %p79, %p80
    %p82 = scmp.ne.s32.totalorder %s74, %s76
    %p83 = scmp.eq.s32.totalorder %s19, 1
    %p84 = por %p82, %p83
    %p85 = scmp.ne.s32.totalorder %s76, %s77
    %p86 = scmp.eq.s32.totalorder %s19, 0
    %p87 = por %p85, %p86
    %p88 = scmp.ne.s32.totalorder %s76, %s77
    %p89 = scmp.eq.s32.totalorder %s20, 1
    %p90 = por %p88, %p89
    %p92 = scmp.ne.s32.totalorder %s77, %s91
    %p93 = scmp.eq.s32.totalorder %s20, 0
    %p94 = por %p92, %p93
    %s96 = sadd.s32 %s95, 1
    %p99 = scmp.eq.s32.totalorder %s14, 1
    %p100 = scmp.ne.s32.totalorder %s95, %s97
    %p101 = scmp.eq.s32.totalorder %s14, 0
    %p102 = por %p100, %p101
    %p103 = scmp.ne.s32.totalorder %s95, %s97
    %p104 = scmp.eq.s32.totalorder %s19, 1
    %p105 = por %p103, %p104
    %p106 = scmp.ne.s32.totalorder %s97, %s98
    %p107 = scmp.eq.s32.totalorder %s19, 0
    %p108 = por %p106, %p107
    %p109 = scmp.ne.s32.totalorder %s97, %s98
    %p110 = scmp.eq.s32.totalorder %s20, 1
    %p111 = por %p109, %p110
    %p113 = scmp.ne.s32.totalorder %s98, %s112
    %p114 = scmp.eq.s32.totalorder %s20, 0
    %p115 = por %p113, %p114
    %s117 = sadd.s32 %s116, 1
    %p120 = scmp.eq.s32.totalorder %s14, 1
    %p121 = scmp.ne.s32.totalorder %s116, %s118
    %p122 = scmp.eq.s32.totalorder %s14, 0
    %p123 = por %p121, %p122
    %p124 = scmp.ne.s32.totalorder %s116, %s118
    %p125 = scmp.eq.s32.totalorder %s19, 1
    %p126 = por %p124, %p125
    %p127 = scmp.ne.s32.totalorder %s118, %s119
    %p128 = scmp.eq.s32.totalorder %s19, 0
    %p129 = por %p127, %p128
    %p130 = scmp.ne.s32.totalorder %s118, %s119
    %p131 = scmp.eq.s32.totalorder %s20, 1
    %p132 = por %p130, %p131
    %p134 = scmp.ne.s32.totalorder %s119, %s133
    %p135 = scmp.eq.s32.totalorder %s20, 0
    %p136 = por %p134, %p135
    %s138 = sadd.s32 %s137, 1
    %p141 = scmp.eq.s32.totalorder %s14, 1
    %p142 = scmp.ne.s32.totalorder %s137, %s139
    %p143 = scmp.eq.s32.totalorder %s14, 0
    %p144 = por %p142, %p143
    %p145 = scmp.ne.s32.totalorder %s137, %s139
    %p146 = scmp.eq.s32.totalorder %s19, 1
    %p147 = por %p145, %p146
    %p148 = scmp.ne.s32.totalorder %s139, %s140
    %p149 = scmp.eq.s32.totalorder %s19, 0
    %p150 = por %p148, %p149
    %p151 = scmp.ne.s32.totalorder %s139, %s140
    %p152 = scmp.eq.s32.totalorder %s20, 1
    %p153 = por %p151, %p152
    %p155 = scmp.ne.s32.totalorder %s140, %s154
    %p156 = scmp.eq.s32.totalorder %s20, 0
    %p157 = por %p155, %p156
    %s159 = sadd.s32 %s158, 1
    %p162 = scmp.eq.s32.totalorder %s14, 1
    %p163 = scmp.ne.s32.totalorder %s158, %s160
    %p164 = scmp.eq.s32.totalorder %s14, 0
    %p165 = por %p163, %p164
    %p166 = scmp.ne.s32.totalorder %s158, %s160
    %p167 = scmp.eq.s32.totalorder %s19, 1
    %p168 = por %p166, %p167
    %p169 = scmp.ne.s32.totalorder %s160, %s161
    %p170 = scmp.eq.s32.totalorder %s19, 0
    %p171 = por %p169, %p170
    %p172 = scmp.ne.s32.totalorder %s160, %s161
    %p173 = scmp.eq.s32.totalorder %s20, 1
    %p174 = por %p172, %p173
    %p176 = scmp.ne.s32.totalorder %s161, %s175
    %p177 = scmp.eq.s32.totalorder %s20, 0
    %p178 = por %p176, %p177
    %s180 = sadd.s32 %s179, 1
    %p183 = scmp.eq.s32.totalorder %s14, 1
    %p184 = scmp.ne.s32.totalorder %s179, %s181
    %p185 = scmp.eq.s32.totalorder %s14, 0
    %p186 = por %p184, %p185
    %p187 = scmp.ne.s32.totalorder %s179, %s181
    %p188 = scmp.eq.s32.totalorder %s19, 1
    %p189 = por %p187, %p188
    %p190 = scmp.ne.s32.totalorder %s181, %s182
    %p191 = scmp.eq.s32.totalorder %s19, 0
    %p192 = por %p190, %p191
    %p193 = scmp.ne.s32.totalorder %s181, %s182
    %p194 = scmp.eq.s32.totalorder %s20, 1
    %p195 = por %p193, %p194
    %p197 = scmp.ne.s32.totalorder %s182, %s196
    %p198 = scmp.eq.s32.totalorder %s20, 0
    %p199 = por %p197, %p198
    %s200 = ssub.s32 %s14, %s21
    %p201 = scmp.eq.s32.totalorder %s200, 0
    %s203 = sadd.s32 %s202, 1
    %s204 = scalar_select %p201, %s202, %s203
    %p207 = pneg %p201
    %p208 = scmp.eq.s32.totalorder %s14, 1
    %p209 = por %p207, %p208
    %p210 = scmp.ne.s32.totalorder %s202, %s205
    %p211 = scmp.eq.s32.totalorder %s14, 0
    %p212 = por %p210, %p211
    %p213 = scmp.ne.s32.totalorder %s202, %s205
    %p214 = scmp.eq.s32.totalorder %s19, 1
    %p215 = por %p213, %p214
    %p216 = scmp.ne.s32.totalorder %s205, %s206
    %p217 = scmp.eq.s32.totalorder %s19, 0
    %p218 = por %p216, %p217
    %p219 = scmp.ne.s32.totalorder %s205, %s206
    %p220 = scmp.eq.s32.totalorder %s20, 1
    %p221 = por %p219, %p220
    %p223 = scmp.ne.s32.totalorder %s206, %s222
    %p224 = scmp.eq.s32.totalorder %s20, 0
    %p225 = por %p223, %p224
    %p226 = scmp.le.s32.totalorder 1, %s14
    %p227 = scmp.lt.s32.totalorder %s14, 3
    %p228 = pnand %p226, %p227
    %p229 = pneg %p228
    // Predicated region
    $region9: #{up_pallas.1} parent=5 // pred_check
      _
    $region10: #{up_pallas.1} parent=5 // pred_check_branch
      %231 = sbr.rel (%p228) target = $region12
    $region11: #{up_pallas.1} parent=5 // pred_region
      %s232 = ssub.s32 %s14, 1
      // Predicated region
      $region13: #{up_pallas.1} parent=11 // pred_check
        %p233 = pneg %p87
      $region14: #{up_pallas.1} parent=11 // pred_check_branch
        %235 = sbr.rel (%p233) target = $region16
      $region15: #{up_pallas.1} parent=11 // pred_region
        _
      $region16: #{up_pallas.1} parent=11 // pred_fallthru
        _
      // Predicated region
      $region17: #{up_pallas.1} parent=11 // pred_check
        %p236 = pneg %p108
      $region18: #{up_pallas.1} parent=11 // pred_check_branch
        %238 = sbr.rel (%p236) target = $region20
      $region19: #{up_pallas.1} parent=11 // pred_region
        _
      $region20: #{up_pallas.1} parent=11 // pred_fallthru
        _
      // Predicated region
      $region21: #{up_pallas.1} parent=11 // pred_check
        %p239 = pneg %p129
      $region22: #{up_pallas.1} parent=11 // pred_check_branch
        %241 = sbr.rel (%p239) target = $region24
      $region23: #{up_pallas.1} parent=11 // pred_region
        _
      $region24: #{up_pallas.1} parent=11 // pred_fallthru
        _
      // Predicated region
      $region25: #{up_pallas.1} parent=11 // pred_check
        %p242 = pneg %p150
      $region26: #{up_pallas.1} parent=11 // pred_check_branch
        %244 = sbr.rel (%p242) target = $region28
      $region27: #{up_pallas.1} parent=11 // pred_region
        _
      $region28: #{up_pallas.1} parent=11 // pred_fallthru
        _
      // Predicated region
      $region29: #{up_pallas.1} parent=11 // pred_check
        %p245 = pneg %p171
      $region30: #{up_pallas.1} parent=11 // pred_check_branch
        %247 = sbr.rel (%p245) target = $region32
      $region31: #{up_pallas.1} parent=11 // pred_region
        _
      $region32: #{up_pallas.1} parent=11 // pred_fallthru
        _
      // Predicated region
      $region33: #{up_pallas.1} parent=11 // pred_check
        %p248 = pneg %p192
      $region34: #{up_pallas.1} parent=11 // pred_check_branch
        %250 = sbr.rel (%p248) target = $region36
      $region35: #{up_pallas.1} parent=11 // pred_region
        _
      $region36: #{up_pallas.1} parent=11 // pred_fallthru
        _
    $region12: #{up_pallas.1} parent=5 // pred_fallthru
      _
    %p251 = scmp.lt.s32.totalorder %s14, 2
    // Predicated region
    $region37: #{up_pallas.1} parent=5 // pred_check
      %p252 = pneg %p251
    $region38: #{up_pallas.1} parent=5 // pred_check_branch
      %254 = sbr.rel (%p252) target = $region40
    $region39: #{up_pallas.1} parent=5 // pred_region
      // Predicated region
      $region41: #{up_pallas.1} parent=39 // pred_check
        %p255 = pneg %p34
      $region42: #{up_pallas.1} parent=39 // pred_check_branch
        %257 = sbr.rel (%p255) target = $region44
      $region43: #{up_pallas.1} parent=39 // pred_region
        %p258 = scmp.lt.s32.totalorder %s14, 1
        %s259 = scalar_select %p258, %s14, 1
        %s260 = smul.addr %s259, 3
        %s261 = smul.addr %s260, 2
        %s262 = scalar_lea.vmem %s0, %s261
      $region44: #{up_pallas.1} parent=39 // pred_fallthru
        _
      // Predicated region
      $region45: #{up_pallas.1} parent=39 // pred_check
        %p263 = pneg %p60
      $region46: #{up_pallas.1} parent=39 // pred_check_branch
        %265 = sbr.rel (%p263) target = $region48
      $region47: #{up_pallas.1} parent=39 // pred_region
        %p266 = scmp.lt.s32.totalorder %s14, 1
        %s267 = scalar_select %p266, %s14, 1
        %s268 = smul.addr %s267, 4
        %s269 = scalar_lea.vmem %s1, %s268
      $region48: #{up_pallas.1} parent=39 // pred_fallthru
        _
    $region40: #{up_pallas.1} parent=5 // pred_fallthru
      _
    %p270 = scmp.le.s32.totalorder 1, %s14
    %p271 = scmp.lt.s32.totalorder %s14, 3
    %p272 = pnand %p270, %p271
    %p273 = pneg %p272
    // Predicated region
    $region49: #{up_pallas.1} parent=5 // pred_check
      _
    $region50: #{up_pallas.1} parent=5 // pred_check_branch
      %275 = sbr.rel (%p272) target = $region52
    $region51: #{up_pallas.1} parent=5 // pred_region
      %s276 = ssub.s32 %s14, 1
      %p277 = scmp.lt.s32.totalorder %s19, 1
      %s278 = scalar_select %p277, %s19, 1
      %s279 = smul.addr %s278, 3
      %s280 = smul.addr %s279, 2
      %s281 = scalar_lea.vmem %s0, %s280
      %p282 = pneg %p40
      %p283 = pneg %p37
      %p284 = scmp.lt.s32.totalorder %s19, 1
      %s285 = scalar_select %p284, %s19, 1
      %s286 = smul.addr %s285, 4
      %s287 = scalar_lea.vmem %s1, %s286
      %p288 = pneg %p66
      %p289 = pneg %p63
      %p290 = pneg %p87
      %p291 = pneg %p84
      %p292 = pneg %p108
      %p293 = pneg %p105
      %p294 = pneg %p129
      %p295 = pneg %p126
      %p296 = pneg %p150
      %p297 = pneg %p147
      %p298 = pneg %p171
      %p299 = pneg %p168
      %p300 = pneg %p192
      %p301 = pneg %p189
      %p302 = pneg %p218
      %p303 = pneg %p215
      %p304 = scmp.lt.s32.totalorder %s19, 1
      %s305 = scalar_select %p304, %s19, 1
      %s306 = smul.addr %s305, 3
      %s307 = smul.addr %s306, 4
      %s308 = scalar_lea.vmem %s8, %s307
      %p309 = scmp.lt.s32.totalorder %s19, 1
      %s310 = scalar_select %p309, %s19, 1
      %s311 = smul.addr %s310, 3
      %s312 = smul.addr %s311, 2
      %s313 = scalar_lea.vmem %s0, %s312
      %p314 = scmp.lt.s32.totalorder %s19, 1
      %s315 = scalar_select %p314, %s19, 1
      %s316 = smul.addr %s315, 4
      %s317 = scalar_lea.vmem %s1, %s316
      %p318 = scmp.lt.s32.totalorder %s19, 1
      %s319 = scalar_select %p318, %s19, 1
      %s320 = smul.addr %s319, 3
      %s321 = smul.addr %s320, 4
      %s322 = scalar_lea.vmem %s8, %s321
      %v324 = vld [vmem:[%s317] sm:$0xf]
      %v325 = vld [vmem:[%s2] sm:$0xff]
      %v326 = vld [vmem:[%s2 + $0x8] sm:$0xff]
      %v327 = vld [vmem:[%s2 + $0x10] sm:$0xff]
      %v328 = vld [vmem:[%s2 + $0x18] sm:$0xff]
      %v329 = vld [vmem:[%s2 + $0x20] sm:$0xff]
      %v330 = vld [vmem:[%s2 + $0x28] sm:$0xff]
      %v331 = vld [vmem:[%s2 + $0x30] sm:$0xff]
      %v332 = vld [vmem:[%s2 + $0x38] sm:$0xff]
      %v333 = vld [vmem:[%s2 + $0x40] sm:$0xff]
      %v334 = vld [vmem:[%s2 + $0x48] sm:$0xff]
      %v335 = vld [vmem:[%s2 + $0x50] sm:$0xff]
      %v336 = vld [vmem:[%s2 + $0x58] sm:$0xff]
      %v337 = vld [vmem:[%s2 + $0x60] sm:$0xff]
      %v338 = vld [vmem:[%s2 + $0x68] sm:$0xff]
      %v339 = vld [vmem:[%s2 + $0x70] sm:$0xff]
      %v340 = vld [vmem:[%s2 + $0x78] sm:$0xff]
      %v341 = vld [vmem:[%s2 + $0x80] sm:$0xff]
      %v342 = vld [vmem:[%s2 + $0x88] sm:$0xff]
      %v343 = vld [vmem:[%s2 + $0x90] sm:$0xff]
      %v344 = vld [vmem:[%s2 + $0x98] sm:$0xff]
      %v345 = vld [vmem:[%s2 + $0xa0] sm:$0xff]
      %v346 = vld [vmem:[%s2 + $0xa8] sm:$0xff]
      %v347 = vld [vmem:[%s2 + $0xb0] sm:$0xff]
      %v348 = vld [vmem:[%s2 + $0xb8] sm:$0xff]
      %vm349 = vcmask 523264
      %v351 = vsel %vm349, %v324, 0
      %353 = vmatprep.subr.mxu0 %v326
      %354 = vmatpush1.msra.mxu0 %v325
      %355 = vmatprep.subr.mxu0 %v329
      %356 = vmatpush1.msra.mxu0 %v328
      %357 = vmatprep.subr.mxu0 %v332
      %358 = vmatpush1.msra.mxu0 %v331
      %359 = vmatprep.subr.mxu0 %v335
      %360 = vmatpush1.msra.mxu0 %v334
      %361 = vmatprep.subr.mxu0 %v338
      %362 = vmatpush1.msra.mxu0 %v337
      %363 = vmatprep.subr.mxu0 %v341
      %364 = vmatpush1.msra.mxu0 %v340
      %365 = vmatprep.subr.mxu0 %v344
      %366 = vmatpush1.msra.mxu0 %v343
      %367 = vmatprep.subr.mxu0 %v347
      %368 = vmatpush1.msra.mxu0 %v346
      %369 = vmatprep.subr.mxu0 0.0
      %370 = vmatpush1.msra.mxu0 0.0
      %371 = vmatprep.subr.mxu0 0.0
      %372 = vmatpush1.msra.mxu0 0.0
      %373 = vmatprep.subr.mxu0 0.0
      %374 = vmatpush1.msra.mxu0 0.0
      %375 = vmatprep.subr.mxu0 0.0
      %376 = vmatpush1.msra.mxu0 0.0
      %377 = vmatprep.subr.mxu0 0.0
      %378 = vmatpush1.msra.mxu0 0.0
      %379 = vmatprep.subr.mxu0 0.0
      %380 = vmatpush1.msra.mxu0 0.0
      %381 = vmatprep.subr.mxu0 0.0
      %382 = vmatpush1.msra.mxu0 0.0
      %383 = vmatprep.subr.mxu0 0.0
      %384 = vmatpush1.msra.mxu0 0.0
      %385 = vmatprep.subr.mxu0 0.0
      %386 = vmatpush1.msra.mxu0 0.0
      %387 = vmatprep.subr.mxu0 0.0
      %388 = vmatpush1.msra.mxu0 0.0
      %389 = vmatprep.subr.mxu0 0.0
      %390 = vmatpush1.msra.mxu0 0.0
      %391 = vmatprep.subr.mxu0 0.0
      %392 = vmatpush1.msra.mxu0 0.0
      %393 = vmatprep.subr.mxu0 0.0
      %394 = vmatpush1.msra.mxu0 0.0
      %395 = vmatprep.subr.mxu0 0.0
      %396 = vmatpush1.msra.mxu0 0.0
      %397 = vmatprep.subr.mxu0 0.0
      %398 = vmatpush1.msra.mxu0 0.0
      %399 = vmatprep.subr.mxu0 0.0
      %400 = vmatpush1.msra.mxu0 0.0
      %401 = vmatprep.subr.mxu0 0.0
      %402 = vmatpush1.msra.mxu0 0.0
      %403 = vmatprep.subr.mxu0 0.0
      %404 = vmatpush1.msra.mxu0 0.0
      %405 = vmatprep.subr.mxu0 0.0
      %406 = vmatpush1.msra.mxu0 0.0
      %407 = vmatprep.subr.mxu0 0.0
      %408 = vmatpush1.msra.mxu0 0.0
      %409 = vmatprep.subr.mxu0 0.0
      %410 = vmatpush1.msra.mxu0 0.0
      %411 = vmatprep.subr.mxu0 0.0
      %412 = vmatpush1.msra.mxu0 0.0
      %413 = vmatprep.subr.mxu0 0.0
      %414 = vmatpush1.msra.mxu0 0.0
      %415 = vmatprep.subr.mxu0 0.0
      %416 = vmatpush1.msra.mxu0 0.0
      %417 = vmatprep.mubr.f32.mxu0 0.0
      %418 = vmatmul.mubr.f32.gmra.mrb[0].mxu0 %v351
      %v419 = vpop.f32.mrb[0].mxu0
      %v420 = vadd.f32 0.0, %v419
      %v421 = vpop.f32.mrb[0].mxu0
      %v422 = vadd.f32 0.0, %v421
      %423 = vdwg.mxu0
      %424 = vmatprep.subr.mxu0 0.0
      %425 = vmatpush1.msra.mxu0 %v327
      %426 = vmatprep.subr.mxu0 0.0
      %427 = vmatpush1.msra.mxu0 %v330
      %428 = vmatprep.subr.mxu0 0.0
      %429 = vmatpush1.msra.mxu0 %v333
      %430 = vmatprep.subr.mxu0 0.0
      %431 = vmatpush1.msra.mxu0 %v336
      %432 = vmatprep.subr.mxu0 0.0
      %433 = vmatpush1.msra.mxu0 %v339
      %434 = vmatprep.subr.mxu0 0.0
      %435 = vmatpush1.msra.mxu0 %v342
      %436 = vmatprep.subr.mxu0 0.0
      %437 = vmatpush1.msra.mxu0 %v345
      %438 = vmatprep.subr.mxu0 0.0
      %439 = vmatpush1.msra.mxu0 %v348
      %440 = vmatprep.subr.mxu0 0.0
      %441 = vmatpush1.msra.mxu0 0.0
      %442 = vmatprep.subr.mxu0 0.0
      %443 = vmatpush1.msra.mxu0 0.0
      %444 = vmatprep.subr.mxu0 0.0
      %445 = vmatpush1.msra.mxu0 0.0
      %446 = vmatprep.subr.mxu0 0.0
      %447 = vmatpush1.msra.mxu0 0.0
      %448 = vmatprep.subr.mxu0 0.0
      %449 = vmatpush1.msra.mxu0 0.0
      %450 = vmatprep.subr.mxu0 0.0
      %451 = vmatpush1.msra.mxu0 0.0
      %452 = vmatprep.subr.mxu0 0.0
      %453 = vmatpush1.msra.mxu0 0.0
      %454 = vmatprep.subr.mxu0 0.0
      %455 = vmatpush1.msra.mxu0 0.0
      %456 = vmatprep.subr.mxu0 0.0
      %457 = vmatpush1.msra.mxu0 0.0
      %458 = vmatprep.subr.mxu0 0.0
      %459 = vmatpush1.msra.mxu0 0.0
      %460 = vmatprep.subr.mxu0 0.0
      %461 = vmatpush1.msra.mxu0 0.0
      %462 = vmatprep.subr.mxu0 0.0
      %463 = vmatpush1.msra.mxu0 0.0
      %464 = vmatprep.subr.mxu0 0.0
      %465 = vmatpush1.msra.mxu0 0.0
      %466 = vmatprep.subr.mxu0 0.0
      %467 = vmatpush1.msra.mxu0 0.0
      %468 = vmatprep.subr.mxu0 0.0
      %469 = vmatpush1.msra.mxu0 0.0
      %470 = vmatprep.subr.mxu0 0.0
      %471 = vmatpush1.msra.mxu0 0.0
      %472 = vmatprep.subr.mxu0 0.0
      %473 = vmatpush1.msra.mxu0 0.0
      %474 = vmatprep.subr.mxu0 0.0
      %475 = vmatpush1.msra.mxu0 0.0
      %476 = vmatprep.subr.mxu0 0.0
      %477 = vmatpush1.msra.mxu0 0.0
      %478 = vmatprep.subr.mxu0 0.0
      %479 = vmatpush1.msra.mxu0 0.0
      %480 = vmatprep.subr.mxu0 0.0
      %481 = vmatpush1.msra.mxu0 0.0
      %482 = vmatprep.subr.mxu0 0.0
      %483 = vmatpush1.msra.mxu0 0.0
      %484 = vmatprep.subr.mxu0 0.0
      %485 = vmatpush1.msra.mxu0 0.0
      %486 = vmatprep.subr.mxu0 0.0
      %487 = vmatpush1.msra.mxu0 0.0
      %488 = vmatprep.mubr.f32.mxu0 0.0
      %489 = vmatmul.mubr.f32.gmra.mrb[0].mxu0 %v351
      %v490 = vpop.f32.mrb[0].mxu0
      %v491 = vadd.f32 0.0, %v490
      %v492 = vpop.f32.mrb[0].mxu0
      %493 = vdwg.mxu0
      %v494 = vpack.c.bf16 %v420, %v420
      %v495 = vpack.c.bf16 %v422, %v422
      %v496 = vpack.c.bf16 %v491, %v491
      %v497 = vld [vmem:[%s313] sm:$0x3f]
      %v499 = vcombine.high %v497, %v497
      %v501 = vunpack.c.l.s4 1983009808
      %v502 = vunpack.c.0.s8 %v501
      %v503 = vlaneseq
      %v504 = vshrl.u32 %v503, 7
      %v505 = vsub.s32 %v502, %v504
      %v506 = vrot.slane %v497, %v505
      %v508 = vunpack.c.l.s4 1983009808
      %v509 = vunpack.c.0.s8 %v508
      %v510 = vlaneseq
      %v511 = vshrl.u32 %v510, 7
      %v512 = vsub.s32 %v509, %v511
      %v513 = vrot.slane %v499, %v512
      %v514 = vcombine.high %v506, %v506
      %v518 = vrot.slane %v494, 6
      %v519 = vrot.slane %v495, 6
      %v520 = vrot.slane %v496, 6
      %vm521 = vcmask 1041408
      %v524 = vsel %vm521, %v506, %v518
      %v527 = vsel %vm521, %v514, %v519
      %v530 = vsel %vm521, %v513, %v520
      %v531 = vld [vmem:[%s3] sm:$0xf]
      %s532 = scalar_lea.vmem %s3, 4
      %v533 = vld [vmem:[%s532] sm:$0xf]
      %537 = vrot.lane.b32.xlu0 %v524, 127
      %v538 = vpop.permute.xlu0 %537
      %539 = vrot.lane.b32.xlu0 %v527, 127
      %v540 = vpop.permute.xlu0 %539
      %541 = vrot.lane.b32.xlu0 %v530, 127
      %v542 = vpop.permute.xlu0 %541
      %vm543 = vcmask 1039360
      %v544 = vsel %vm543, %v538, %v540
      %v545 = vsel %vm543, %v540, %v542
      %vm546 = vcmask 64512
      %v548 = vsel %vm546, %v533, 0
      %vm550 = vcmask 1043456
      %v552 = vsel %vm550, %v544, 0
      %v555 = vsel %vm550, %v545, 0
      %v558 = vsel %vm550, %v542, 0
      %560 = vmatprep.subr.bf16.mxu0 %v555
      %561 = vmatpush1.bf16.msra.mxu0 %v552
      %562 = vmatprep.subr.bf16.mxu0 0
      %563 = vmatpush1.bf16.msra.mxu0 0
      %564 = vmatprep.subr.bf16.mxu0 0
      %565 = vmatpush1.bf16.msra.mxu0 0
      %566 = vmatprep.subr.bf16.mxu0 0
      %567 = vmatpush1.bf16.msra.mxu0 0
      %568 = vmatprep.subr.bf16.mxu0 0
      %569 = vmatpush1.bf16.msra.mxu0 0
      %570 = vmatprep.subr.bf16.mxu0 0
      %571 = vmatpush1.bf16.msra.mxu0 0
      %572 = vmatprep.subr.bf16.mxu0 0
      %573 = vmatpush1.bf16.msra.mxu0 0
      %574 = vmatprep.subr.bf16.mxu0 0
      %575 = vmatpush1.bf16.msra.mxu0 0
      %576 = vmatprep.subr.bf16.mxu0 0
      %577 = vmatpush1.bf16.msra.mxu0 0
      %578 = vmatprep.subr.bf16.mxu0 0
      %579 = vmatpush1.bf16.msra.mxu0 0
      %580 = vmatprep.subr.bf16.mxu0 0
      %581 = vmatpush1.bf16.msra.mxu0 0
      %582 = vmatprep.subr.bf16.mxu0 0
      %583 = vmatpush1.bf16.msra.mxu0 0
      %584 = vmatprep.subr.bf16.mxu0 0
      %585 = vmatpush1.bf16.msra.mxu0 0
      %586 = vmatprep.subr.bf16.mxu0 0
      %587 = vmatpush1.bf16.msra.mxu0 0
      %588 = vmatprep.subr.bf16.mxu0 0
      %589 = vmatpush1.bf16.msra.mxu0 0
      %590 = vmatprep.subr.bf16.mxu0 0
      %591 = vmatpush1.bf16.msra.mxu0 0
      %592 = vmatprep.mubr.bf16.mxu0 0
      %593 = vmatmul.mubr.bf16.gmra.mrb[0].mxu0 %v548
      %v594 = vpop.f32.mrb[0].mxu0
      %v595 = vadd.f32 0.0, %v594
      %v596 = vpop.f32.mrb[0].mxu0
      %v597 = vadd.f32 0.0, %v596
      %v598 = vpop.f32.mrb[0].mxu0
      %v599 = vpop.f32.mrb[0].mxu0
      %600 = vdwg.mxu0
      %601 = vmatprep.subr.bf16.mxu0 0
      %602 = vmatpush1.bf16.msra.mxu0 %v558
      %603 = vmatprep.subr.bf16.mxu0 0
      %604 = vmatpush1.bf16.msra.mxu0 0
      %605 = vmatprep.subr.bf16.mxu0 0
      %606 = vmatpush1.bf16.msra.mxu0 0
      %607 = vmatprep.subr.bf16.mxu0 0
      %608 = vmatpush1.bf16.msra.mxu0 0
      %609 = vmatprep.subr.bf16.mxu0 0
      %610 = vmatpush1.bf16.msra.mxu0 0
      %611 = vmatprep.subr.bf16.mxu0 0
      %612 = vmatpush1.bf16.msra.mxu0 0
      %613 = vmatprep.subr.bf16.mxu0 0
      %614 = vmatpush1.bf16.msra.mxu0 0
      %615 = vmatprep.subr.bf16.mxu0 0
      %616 = vmatpush1.bf16.msra.mxu0 0
      %617 = vmatprep.subr.bf16.mxu0 0
      %618 = vmatpush1.bf16.msra.mxu0 0
      %619 = vmatprep.subr.bf16.mxu0 0
      %620 = vmatpush1.bf16.msra.mxu0 0
      %621 = vmatprep.subr.bf16.mxu0 0
      %622 = vmatpush1.bf16.msra.mxu0 0
      %623 = vmatprep.subr.bf16.mxu0 0
      %624 = vmatpush1.bf16.msra.mxu0 0
      %625 = vmatprep.subr.bf16.mxu0 0
      %626 = vmatpush1.bf16.msra.mxu0 0
      %627 = vmatprep.subr.bf16.mxu0 0
      %628 = vmatpush1.bf16.msra.mxu0 0
      %629 = vmatprep.subr.bf16.mxu0 0
      %630 = vmatpush1.bf16.msra.mxu0 0
      %631 = vmatprep.subr.bf16.mxu0 0
      %632 = vmatpush1.bf16.msra.mxu0 0
      %633 = vmatprep.mubr.bf16.mxu0 0
      %634 = vmatmul.mubr.bf16.gmra.mrb[0].mxu0 %v548
      %v635 = vpop.f32.mrb[0].mxu0
      %v636 = vadd.f32 0.0, %v635
      %v637 = vpop.f32.mrb[0].mxu0
      %v638 = vpop.f32.mrb[0].mxu0
      %v639 = vpop.f32.mrb[0].mxu0
      %640 = vdwg.mxu0
      %v642 = vsel %vm546, %v531, 0
      %v644 = vsel %vm550, %v524, 0
      %v646 = vsel %vm550, %v527, 0
      %v648 = vsel %vm550, %v530, 0
      %650 = vmatprep.subr.bf16.mxu0 %v646
      %651 = vmatpush1.bf16.msra.mxu0 %v644
      %652 = vmatprep.subr.bf16.mxu0 0
      %653 = vmatpush1.bf16.msra.mxu0 0
      %654 = vmatprep.subr.bf16.mxu0 0
      %655 = vmatpush1.bf16.msra.mxu0 0
      %656 = vmatprep.subr.bf16.mxu0 0
      %657 = vmatpush1.bf16.msra.mxu0 0
      %658 = vmatprep.subr.bf16.mxu0 0
      %659 = vmatpush1.bf16.msra.mxu0 0
      %660 = vmatprep.subr.bf16.mxu0 0
      %661 = vmatpush1.bf16.msra.mxu0 0
      %662 = vmatprep.subr.bf16.mxu0 0
      %663 = vmatpush1.bf16.msra.mxu0 0
      %664 = vmatprep.subr.bf16.mxu0 0
      %665 = vmatpush1.bf16.msra.mxu0 0
      %666 = vmatprep.subr.bf16.mxu0 0
      %667 = vmatpush1.bf16.msra.mxu0 0
      %668 = vmatprep.subr.bf16.mxu0 0
      %669 = vmatpush1.bf16.msra.mxu0 0
      %670 = vmatprep.subr.bf16.mxu0 0
      %671 = vmatpush1.bf16.msra.mxu0 0
      %672 = vmatprep.subr.bf16.mxu0 0
      %673 = vmatpush1.bf16.msra.mxu0 0
      %674 = vmatprep.subr.bf16.mxu0 0
      %675 = vmatpush1.bf16.msra.mxu0 0
      %676 = vmatprep.subr.bf16.mxu0 0
      %677 = vmatpush1.bf16.msra.mxu0 0
      %678 = vmatprep.subr.bf16.mxu0 0
      %679 = vmatpush1.bf16.msra.mxu0 0
      %680 = vmatprep.subr.bf16.mxu0 0
      %681 = vmatpush1.bf16.msra.mxu0 0
      %682 = vmatprep.mubr.bf16.mxu0 0
      %683 = vmatmul.mubr.bf16.gmra.mrb[0].mxu0 %v642
      %v684 = vpop.f32.mrb[0].mxu0
      %v685 = vadd.f32 %v595, %v684
      %v686 = vpop.f32.mrb[0].mxu0
      %v687 = vadd.f32 %v597, %v686
      %v688 = vpop.f32.mrb[0].mxu0
      %v689 = vpop.f32.mrb[0].mxu0
      %690 = vdwg.mxu0
      %691 = vmatprep.subr.bf16.mxu0 0
      %692 = vmatpush1.bf16.msra.mxu0 %v648
      %693 = vmatprep.subr.bf16.mxu0 0
      %694 = vmatpush1.bf16.msra.mxu0 0
      %695 = vmatprep.subr.bf16.mxu0 0
      %696 = vmatpush1.bf16.msra.mxu0 0
      %697 = vmatprep.subr.bf16.mxu0 0
      %698 = vmatpush1.bf16.msra.mxu0 0
      %699 = vmatprep.subr.bf16.mxu0 0
      %700 = vmatpush1.bf16.msra.mxu0 0
      %701 = vmatprep.subr.bf16.mxu0 0
      %702 = vmatpush1.bf16.msra.mxu0 0
      %703 = vmatprep.subr.bf16.mxu0 0
      %704 = vmatpush1.bf16.msra.mxu0 0
      %705 = vmatprep.subr.bf16.mxu0 0
      %706 = vmatpush1.bf16.msra.mxu0 0
      %707 = vmatprep.subr.bf16.mxu0 0
      %708 = vmatpush1.bf16.msra.mxu0 0
      %709 = vmatprep.subr.bf16.mxu0 0
      %710 = vmatpush1.bf16.msra.mxu0 0
      %711 = vmatprep.subr.bf16.mxu0 0
      %712 = vmatpush1.bf16.msra.mxu0 0
      %713 = vmatprep.subr.bf16.mxu0 0
      %714 = vmatpush1.bf16.msra.mxu0 0
      %715 = vmatprep.subr.bf16.mxu0 0
      %716 = vmatpush1.bf16.msra.mxu0 0
      %717 = vmatprep.subr.bf16.mxu0 0
      %718 = vmatpush1.bf16.msra.mxu0 0
      %719 = vmatprep.subr.bf16.mxu0 0
      %720 = vmatpush1.bf16.msra.mxu0 0
      %721 = vmatprep.subr.bf16.mxu0 0
      %722 = vmatpush1.bf16.msra.mxu0 0
      %723 = vmatprep.mubr.bf16.mxu0 0
      %724 = vmatmul.mubr.bf16.gmra.mrb[0].mxu0 %v642
      %v725 = vpop.f32.mrb[0].mxu0
      %v726 = vadd.f32 %v636, %v725
      %v727 = vpop.f32.mrb[0].mxu0
      %v728 = vpop.f32.mrb[0].mxu0
      %v729 = vpop.f32.mrb[0].mxu0
      %730 = vdwg.mxu0
      %s731 = scalar_lea.vmem %s3, 8
      %v732 = vld [vmem:[%s731] sm:$0xf]
      %733 = vrot.lane.b32.xlu0 %v524, 126
      %v734 = vpop.permute.xlu0 %733
      %735 = vrot.lane.b32.xlu0 %v527, 126
      %v736 = vpop.permute.xlu0 %735
      %737 = vrot.lane.b32.xlu0 %v530, 126
      %v738 = vpop.permute.xlu0 %737
      %vm739 = vcmask 1031168
      %v740 = vsel %vm739, %v734, %v736
      %v741 = vsel %vm739, %v736, %v738
      %v743 = vsel %vm546, %v732, 0
      %v746 = vsel %vm550, %v740, 0
      %v749 = vsel %vm550, %v741, 0
      %v752 = vsel %vm550, %v738, 0
      %754 = vmatprep.subr.bf16.mxu0 %v749
      %755 = vmatpush1.bf16.msra.mxu0 %v746
      %756 = vmatprep.subr.bf16.mxu0 0
      %757 = vmatpush1.bf16.msra.mxu0 0
      %758 = vmatprep.subr.bf16.mxu0 0
      %759 = vmatpush1.bf16.msra.mxu0 0
      %760 = vmatprep.subr.bf16.mxu0 0
      %761 = vmatpush1.bf16.msra.mxu0 0
      %762 = vmatprep.subr.bf16.mxu0 0
      %763 = vmatpush1.bf16.msra.mxu0 0
      %764 = vmatprep.subr.bf16.mxu0 0
      %765 = vmatpush1.bf16.msra.mxu0 0
      %766 = vmatprep.subr.bf16.mxu0 0
      %767 = vmatpush1.bf16.msra.mxu0 0
      %768 = vmatprep.subr.bf16.mxu0 0
      %769 = vmatpush1.bf16.msra.mxu0 0
      %770 = vmatprep.subr.bf16.mxu0 0
      %771 = vmatpush1.bf16.msra.mxu0 0
      %772 = vmatprep.subr.bf16.mxu0 0
      %773 = vmatpush1.bf16.msra.mxu0 0
      %774 = vmatprep.subr.bf16.mxu0 0
      %775 = vmatpush1.bf16.msra.mxu0 0
      %776 = vmatprep.subr.bf16.mxu0 0
      %777 = vmatpush1.bf16.msra.mxu0 0
      %778 = vmatprep.subr.bf16.mxu0 0
      %779 = vmatpush1.bf16.msra.mxu0 0
      %780 = vmatprep.subr.bf16.mxu0 0
      %781 = vmatpush1.bf16.msra.mxu0 0
      %782 = vmatprep.subr.bf16.mxu0 0
      %783 = vmatpush1.bf16.msra.mxu0 0
      %784 = vmatprep.subr.bf16.mxu0 0
      %785 = vmatpush1.bf16.msra.mxu0 0
      %786 = vmatprep.mubr.bf16.mxu0 0
      %787 = vmatmul.mubr.bf16.gmra.mrb[0].mxu0 %v743
      %v788 = vpop.f32.mrb[0].mxu0
      %v789 = vadd.f32 0.0, %v788
      %v790 = vpop.f32.mrb[0].mxu0
      %v791 = vadd.f32 0.0, %v790
      %v792 = vpop.f32.mrb[0].mxu0
      %v793 = vpop.f32.mrb[0].mxu0
      %794 = vdwg.mxu0
      %795 = vmatprep.subr.bf16.mxu0 0
      %796 = vmatpush1.bf16.msra.mxu0 %v752
      %797 = vmatprep.subr.bf16.mxu0 0
      %798 = vmatpush1.bf16.msra.mxu0 0
      %799 = vmatprep.subr.bf16.mxu0 0
      %800 = vmatpush1.bf16.msra.mxu0 0
      %801 = vmatprep.subr.bf16.mxu0 0
      %802 = vmatpush1.bf16.msra.mxu0 0
      %803 = vmatprep.subr.bf16.mxu0 0
      %804 = vmatpush1.bf16.msra.mxu0 0
      %805 = vmatprep.subr.bf16.mxu0 0
      %806 = vmatpush1.bf16.msra.mxu0 0
      %807 = vmatprep.subr.bf16.mxu0 0
      %808 = vmatpush1.bf16.msra.mxu0 0
      %809 = vmatprep.subr.bf16.mxu0 0
      %810 = vmatpush1.bf16.msra.mxu0 0
      %811 = vmatprep.subr.bf16.mxu0 0
      %812 = vmatpush1.bf16.msra.mxu0 0
      %813 = vmatprep.subr.bf16.mxu0 0
      %814 = vmatpush1.bf16.msra.mxu0 0
      %815 = vmatprep.subr.bf16.mxu0 0
      %816 = vmatpush1.bf16.msra.mxu0 0
      %817 = vmatprep.subr.bf16.mxu0 0
      %818 = vmatpush1.bf16.msra.mxu0 0
      %819 = vmatprep.subr.bf16.mxu0 0
      %820 = vmatpush1.bf16.msra.mxu0 0
      %821 = vmatprep.subr.bf16.mxu0 0
      %822 = vmatpush1.bf16.msra.mxu0 0
      %823 = vmatprep.subr.bf16.mxu0 0
      %824 = vmatpush1.bf16.msra.mxu0 0
      %825 = vmatprep.subr.bf16.mxu0 0
      %826 = vmatpush1.bf16.msra.mxu0 0
      %827 = vmatprep.mubr.bf16.mxu0 0
      %828 = vmatmul.mubr.bf16.gmra.mrb[0].mxu0 %v743
      %v829 = vpop.f32.mrb[0].mxu0
      %v830 = vadd.f32 0.0, %v829
      %v831 = vpop.f32.mrb[0].mxu0
      %v832 = vpop.f32.mrb[0].mxu0
      %v833 = vpop.f32.mrb[0].mxu0
      %834 = vdwg.mxu0
      %v835 = vadd.f32 %v685, %v789
      %v836 = vadd.f32 %v687, %v791
      %v837 = vadd.f32 %v726, %v830
      %s838 = scalar_lea.vmem %s3, 12
      %v839 = vld [vmem:[%s838] sm:$0xf]
      %840 = vrot.lane.b32.xlu0 %v524, 110
      %v841 = vpop.permute.xlu0 %840
      %842 = vrot.lane.b32.xlu0 %v527, 110
      %v843 = vpop.permute.xlu0 %842
      %844 = vrot.lane.b32.xlu0 %v530, 110
      %v845 = vpop.permute.xlu0 %844
      %vm846 = vcmask 900096
      %v847 = vsel %vm846, %v841, %v843
      %v848 = vsel %vm846, %v843, %v845
      %v850 = vsel %vm546, %v839, 0
      %v853 = vsel %vm550, %v847, 0
      %v856 = vsel %vm550, %v848, 0
      %v859 = vsel %vm550, %v845, 0
      %861 = vmatprep.subr.bf16.mxu0 %v856
      %862 = vmatpush1.bf16.msra.mxu0 %v853
      %863 = vmatprep.subr.bf16.mxu0 0
      %864 = vmatpush1.bf16.msra.mxu0 0
      %865 = vmatprep.subr.bf16.mxu0 0
      %866 = vmatpush1.bf16.msra.mxu0 0
      %867 = vmatprep.subr.bf16.mxu0 0
      %868 = vmatpush1.bf16.msra.mxu0 0
      %869 = vmatprep.subr.bf16.mxu0 0
      %870 = vmatpush1.bf16.msra.mxu0 0
      %871 = vmatprep.subr.bf16.mxu0 0
      %872 = vmatpush1.bf16.msra.mxu0 0
      %873 = vmatprep.subr.bf16.mxu0 0
      %874 = vmatpush1.bf16.msra.mxu0 0
      %875 = vmatprep.subr.bf16.mxu0 0
      %876 = vmatpush1.bf16.msra.mxu0 0
      %877 = vmatprep.subr.bf16.mxu0 0
      %878 = vmatpush1.bf16.msra.mxu0 0
      %879 = vmatprep.subr.bf16.mxu0 0
      %880 = vmatpush1.bf16.msra.mxu0 0
      %881 = vmatprep.subr.bf16.mxu0 0
      %882 = vmatpush1.bf16.msra.mxu0 0
      %883 = vmatprep.subr.bf16.mxu0 0
      %884 = vmatpush1.bf16.msra.mxu0 0
      %885 = vmatprep.subr.bf16.mxu0 0
      %886 = vmatpush1.bf16.msra.mxu0 0
      %887 = vmatprep.subr.bf16.mxu0 0
      %888 = vmatpush1.bf16.msra.mxu0 0
      %889 = vmatprep.subr.bf16.mxu0 0
      %890 = vmatpush1.bf16.msra.mxu0 0
      %891 = vmatprep.subr.bf16.mxu0 0
      %892 = vmatpush1.bf16.msra.mxu0 0
      %893 = vmatprep.mubr.bf16.mxu0 0
      %894 = vmatmul.mubr.bf16.gmra.mrb[0].mxu0 %v850
      %v895 = vpop.f32.mrb[0].mxu0
      %v896 = vadd.f32 0.0, %v895
      %v897 = vpop.f32.mrb[0].mxu0
      %v898 = vadd.f32 0.0, %v897
      %v899 = vpop.f32.mrb[0].mxu0
      %v900 = vpop.f32.mrb[0].mxu0
      %901 = vdwg.mxu0
      %902 = vmatprep.subr.bf16.mxu0 0
      %903 = vmatpush1.bf16.msra.mxu0 %v859
      %904 = vmatprep.subr.bf16.mxu0 0
      %905 = vmatpush1.bf16.msra.mxu0 0
      %906 = vmatprep.subr.bf16.mxu0 0
      %907 = vmatpush1.bf16.msra.mxu0 0
      %908 = vmatprep.subr.bf16.mxu0 0
      %909 = vmatpush1.bf16.msra.mxu0 0
      %910 = vmatprep.subr.bf16.mxu0 0
      %911 = vmatpush1.bf16.msra.mxu0 0
      %912 = vmatprep.subr.bf16.mxu0 0
      %913 = vmatpush1.bf16.msra.mxu0 0
      %914 = vmatprep.subr.bf16.mxu0 0
      %915 = vmatpush1.bf16.msra.mxu0 0
      %916 = vmatprep.subr.bf16.mxu0 0
      %917 = vmatpush1.bf16.msra.mxu0 0
      %918 = vmatprep.subr.bf16.mxu0 0
      %919 = vmatpush1.bf16.msra.mxu0 0
      %920 = vmatprep.subr.bf16.mxu0 0
      %921 = vmatpush1.bf16.msra.mxu0 0
      %922 = vmatprep.subr.bf16.mxu0 0
      %923 = vmatpush1.bf16.msra.mxu0 0
      %924 = vmatprep.subr.bf16.mxu0 0
      %925 = vmatpush1.bf16.msra.mxu0 0
      %926 = vmatprep.subr.bf16.mxu0 0
      %927 = vmatpush1.bf16.msra.mxu0 0
      %928 = vmatprep.subr.bf16.mxu0 0
      %929 = vmatpush1.bf16.msra.mxu0 0
      %930 = vmatprep.subr.bf16.mxu0 0
      %931 = vmatpush1.bf16.msra.mxu0 0
      %932 = vmatprep.subr.bf16.mxu0 0
      %933 = vmatpush1.bf16.msra.mxu0 0
      %934 = vmatprep.mubr.bf16.mxu0 0
      %935 = vmatmul.mubr.bf16.gmra.mrb[0].mxu0 %v850
      %v936 = vpop.f32.mrb[0].mxu0
      %v937 = vadd.f32 0.0, %v936
      %v938 = vpop.f32.mrb[0].mxu0
      %v939 = vpop.f32.mrb[0].mxu0
      %v940 = vpop.f32.mrb[0].mxu0
      %941 = vdwg.mxu0
      %v942 = vadd.f32 %v835, %v896
      %v943 = vadd.f32 %v836, %v898
      %v944 = vadd.f32 %v837, %v937
      %s945 = scalar_lea.vmem %s3, 16
      %v946 = vld [vmem:[%s945] sm:$0xf]
      %947 = vrot.lane.b32.xlu0 %v524, 109
      %v948 = vpop.permute.xlu0 %947
      %949 = vrot.lane.b32.xlu0 %v527, 109
      %v950 = vpop.permute.xlu0 %949
      %951 = vrot.lane.b32.xlu0 %v530, 109
      %v952 = vpop.permute.xlu0 %951
      %vm953 = vcmask 891904
      %v954 = vsel %vm953, %v948, %v950
      %v955 = vsel %vm953, %v950, %v952
      %v957 = vsel %vm546, %v946, 0
      %v960 = vsel %vm550, %v954, 0
      %v963 = vsel %vm550, %v955, 0
      %v966 = vsel %vm550, %v952, 0
      %968 = vmatprep.subr.bf16.mxu0 %v963
      %969 = vmatpush1.bf16.msra.mxu0 %v960
      %970 = vmatprep.subr.bf16.mxu0 0
      %971 = vmatpush1.bf16.msra.mxu0 0
      %972 = vmatprep.subr.bf16.mxu0 0
      %973 = vmatpush1.bf16.msra.mxu0 0
      %974 = vmatprep.subr.bf16.mxu0 0
      %975 = vmatpush1.bf16.msra.mxu0 0
      %976 = vmatprep.subr.bf16.mxu0 0
      %977 = vmatpush1.bf16.msra.mxu0 0
      %978 = vmatprep.subr.bf16.mxu0 0
      %979 = vmatpush1.bf16.msra.mxu0 0
      %980 = vmatprep.subr.bf16.mxu0 0
      %981 = vmatpush1.bf16.msra.mxu0 0
      %982 = vmatprep.subr.bf16.mxu0 0
      %983 = vmatpush1.bf16.msra.mxu0 0
      %984 = vmatprep.subr.bf16.mxu0 0
      %985 = vmatpush1.bf16.msra.mxu0 0
      %986 = vmatprep.subr.bf16.mxu0 0
      %987 = vmatpush1.bf16.msra.mxu0 0
      %988 = vmatprep.subr.bf16.mxu0 0
      %989 = vmatpush1.bf16.msra.mxu0 0
      %990 = vmatprep.subr.bf16.mxu0 0
      %991 = vmatpush1.bf16.msra.mxu0 0
      %992 = vmatprep.subr.bf16.mxu0 0
      %993 = vmatpush1.bf16.msra.mxu0 0
      %994 = vmatprep.subr.bf16.mxu0 0
      %995 = vmatpush1.bf16.msra.mxu0 0
      %996 = vmatprep.subr.bf16.mxu0 0
      %997 = vmatpush1.bf16.msra.mxu0 0
      %998 = vmatprep.subr.bf16.mxu0 0
      %999 = vmatpush1.bf16.msra.mxu0 0
      %1000 = vmatprep.mubr.bf16.mxu0 0
      %1001 = vmatmul.mubr.bf16.gmra.mrb[0].mxu0 %v957
      %v1002 = vpop.f32.mrb[0].mxu0
      %v1003 = vadd.f32 0.0, %v1002
      %v1004 = vpop.f32.mrb[0].mxu0
      %v1005 = vadd.f32 0.0, %v1004
      %v1006 = vpop.f32.mrb[0].mxu0
      %v1007 = vpop.f32.mrb[0].mxu0
      %1008 = vdwg.mxu0
      %1009 = vmatprep.subr.bf16.mxu0 0
      %1010 = vmatpush1.bf16.msra.mxu0 %v966
      %1011 = vmatprep.subr.bf16.mxu0 0
      %1012 = vmatpush1.bf16.msra.mxu0 0
      %1013 = vmatprep.subr.bf16.mxu0 0
      %1014 = vmatpush1.bf16.msra.mxu0 0
      %1015 = vmatprep.subr.bf16.mxu0 0
      %1016 = vmatpush1.bf16.msra.mxu0 0
      %1017 = vmatprep.subr.bf16.mxu0 0
      %1018 = vmatpush1.bf16.msra.mxu0 0
      %1019 = vmatprep.subr.bf16.mxu0 0
      %1020 = vmatpush1.bf16.msra.mxu0 0
      %1021 = vmatprep.subr.bf16.mxu0 0
      %1022 = vmatpush1.bf16.msra.mxu0 0
      %1023 = vmatprep.subr.bf16.mxu0 0
      %1024 = vmatpush1.bf16.msra.mxu0 0
      %1025 = vmatprep.subr.bf16.mxu0 0
      %1026 = vmatpush1.bf16.msra.mxu0 0
      %1027 = vmatprep.subr.bf16.mxu0 0
      %1028 = vmatpush1.bf16.msra.mxu0 0
      %1029 = vmatprep.subr.bf16.mxu0 0
      %1030 = vmatpush1.bf16.msra.mxu0 0
      %1031 = vmatprep.subr.bf16.mxu0 0
      %1032 = vmatpush1.bf16.msra.mxu0 0
      %1033 = vmatprep.subr.bf16.mxu0 0
      %1034 = vmatpush1.bf16.msra.mxu0 0
      %1035 = vmatprep.subr.bf16.mxu0 0
      %1036 = vmatpush1.bf16.msra.mxu0 0
      %1037 = vmatprep.subr.bf16.mxu0 0
      %1038 = vmatpush1.bf16.msra.mxu0 0
      %1039 = vmatprep.subr.bf16.mxu0 0
      %1040 = vmatpush1.bf16.msra.mxu0 0
      %1041 = vmatprep.mubr.bf16.mxu0 0
      %1042 = vmatmul.mubr.bf16.gmra.mrb[0].mxu0 %v957
      %v1043 = vpop.f32.mrb[0].mxu0
      %v1044 = vadd.f32 0.0, %v1043
      %v1045 = vpop.f32.mrb[0].mxu0
      %v1046 = vpop.f32.mrb[0].mxu0
      %v1047 = vpop.f32.mrb[0].mxu0
      %1048 = vdwg.mxu0
      %v1049 = vadd.f32 %v942, %v1003
      %v1050 = vadd.f32 %v943, %v1005
      %v1051 = vadd.f32 %v944, %v1044
      %s1052 = scalar_lea.vmem %s3, 20
      %v1053 = vld [vmem:[%s1052] sm:$0xf]
      %1054 = vrot.lane.b32.xlu0 %v524, 108
      %v1055 = vpop.permute.xlu0 %1054
      %1056 = vrot.lane.b32.xlu0 %v527, 108
      %v1057 = vpop.permute.xlu0 %1056
      %1058 = vrot.lane.b32.xlu0 %v530, 108
      %v1059 = vpop.permute.xlu0 %1058
      %vm1060 = vcmask 883712
      %v1061 = vsel %vm1060, %v1055, %v1057
      %v1062 = vsel %vm1060, %v1057, %v1059
      %v1064 = vsel %vm546, %v1053, 0
      %v1067 = vsel %vm550, %v1061, 0
      %v1070 = vsel %vm550, %v1062, 0
      %v1073 = vsel %vm550, %v1059, 0
      %1075 = vmatprep.subr.bf16.mxu0 %v1070
      %1076 = vmatpush1.bf16.msra.mxu0 %v1067
      %1077 = vmatprep.subr.bf16.mxu0 0
      %1078 = vmatpush1.bf16.msra.mxu0 0
      %1079 = vmatprep.subr.bf16.mxu0 0
      %1080 = vmatpush1.bf16.msra.mxu0 0
      %1081 = vmatprep.subr.bf16.mxu0 0
      %1082 = vmatpush1.bf16.msra.mxu0 0
      %1083 = vmatprep.subr.bf16.mxu0 0
      %1084 = vmatpush1.bf16.msra.mxu0 0
      %1085 = vmatprep.subr.bf16.mxu0 0
      %1086 = vmatpush1.bf16.msra.mxu0 0
      %1087 = vmatprep.subr.bf16.mxu0 0
      %1088 = vmatpush1.bf16.msra.mxu0 0
      %1089 = vmatprep.subr.bf16.mxu0 0
      %1090 = vmatpush1.bf16.msra.mxu0 0
      %1091 = vmatprep.subr.bf16.mxu0 0
      %1092 = vmatpush1.bf16.msra.mxu0 0
      %1093 = vmatprep.subr.bf16.mxu0 0
      %1094 = vmatpush1.bf16.msra.mxu0 0
      %1095 = vmatprep.subr.bf16.mxu0 0
      %1096 = vmatpush1.bf16.msra.mxu0 0
      %1097 = vmatprep.subr.bf16.mxu0 0
      %1098 = vmatpush1.bf16.msra.mxu0 0
      %1099 = vmatprep.subr.bf16.mxu0 0
      %1100 = vmatpush1.bf16.msra.mxu0 0
      %1101 = vmatprep.subr.bf16.mxu0 0
      %1102 = vmatpush1.bf16.msra.mxu0 0
      %1103 = vmatprep.subr.bf16.mxu0 0
      %1104 = vmatpush1.bf16.msra.mxu0 0
      %1105 = vmatprep.subr.bf16.mxu0 0
      %1106 = vmatpush1.bf16.msra.mxu0 0
      %1107 = vmatprep.mubr.bf16.mxu0 0
      %1108 = vmatmul.mubr.bf16.gmra.mrb[0].mxu0 %v1064
      %v1109 = vpop.f32.mrb[0].mxu0
      %v1110 = vadd.f32 0.0, %v1109
      %v1111 = vpop.f32.mrb[0].mxu0
      %v1112 = vadd.f32 0.0, %v1111
      %v1113 = vpop.f32.mrb[0].mxu0
      %v1114 = vpop.f32.mrb[0].mxu0
      %1115 = vdwg.mxu0
      %1116 = vmatprep.subr.bf16.mxu0 0
      %1117 = vmatpush1.bf16.msra.mxu0 %v1073
      %1118 = vmatprep.subr.bf16.mxu0 0
      %1119 = vmatpush1.bf16.msra.mxu0 0
      %1120 = vmatprep.subr.bf16.mxu0 0
      %1121 = vmatpush1.bf16.msra.mxu0 0
      %1122 = vmatprep.subr.bf16.mxu0 0
      %1123 = vmatpush1.bf16.msra.mxu0 0
      %1124 = vmatprep.subr.bf16.mxu0 0
      %1125 = vmatpush1.bf16.msra.mxu0 0
      %1126 = vmatprep.subr.bf16.mxu0 0
      %1127 = vmatpush1.bf16.msra.mxu0 0
      %1128 = vmatprep.subr.bf16.mxu0 0
      %1129 = vmatpush1.bf16.msra.mxu0 0
      %1130 = vmatprep.subr.bf16.mxu0 0
      %1131 = vmatpush1.bf16.msra.mxu0 0
      %1132 = vmatprep.subr.bf16.mxu0 0
      %1133 = vmatpush1.bf16.msra.mxu0 0
      %1134 = vmatprep.subr.bf16.mxu0 0
      %1135 = vmatpush1.bf16.msra.mxu0 0
      %1136 = vmatprep.subr.bf16.mxu0 0
      %1137 = vmatpush1.bf16.msra.mxu0 0
      %1138 = vmatprep.subr.bf16.mxu0 0
      %1139 = vmatpush1.bf16.msra.mxu0 0
      %1140 = vmatprep.subr.bf16.mxu0 0
      %1141 = vmatpush1.bf16.msra.mxu0 0
      %1142 = vmatprep.subr.bf16.mxu0 0
      %1143 = vmatpush1.bf16.msra.mxu0 0
      %1144 = vmatprep.subr.bf16.mxu0 0
      %1145 = vmatpush1.bf16.msra.mxu0 0
      %1146 = vmatprep.subr.bf16.mxu0 0
      %1147 = vmatpush1.bf16.msra.mxu0 0
      %1148 = vmatprep.mubr.bf16.mxu0 0
      %1149 = vmatmul.mubr.bf16.gmra.mrb[0].mxu0 %v1064
      %v1150 = vpop.f32.mrb[0].mxu0
      %v1151 = vadd.f32 0.0, %v1150
      %v1152 = vpop.f32.mrb[0].mxu0
      %v1153 = vpop.f32.mrb[0].mxu0
      %v1154 = vpop.f32.mrb[0].mxu0
      %1155 = vdwg.mxu0
      %v1156 = vadd.f32 %v1049, %v1110
      %v1157 = vadd.f32 %v1050, %v1112
      %v1158 = vadd.f32 %v1051, %v1151
      %s1159 = scalar_lea.vmem %s3, 24
      %v1160 = vld [vmem:[%s1159] sm:$0xf]
      %1161 = vrot.lane.b32.xlu0 %v524, 92
      %v1162 = vpop.permute.xlu0 %1161
      %1163 = vrot.lane.b32.xlu0 %v527, 92
      %v1164 = vpop.permute.xlu0 %1163
      %1165 = vrot.lane.b32.xlu0 %v530, 92
      %v1166 = vpop.permute.xlu0 %1165
      %vm1167 = vcmask 752640
      %v1168 = vsel %vm1167, %v1162, %v1164
      %v1169 = vsel %vm1167, %v1164, %v1166
      %v1171 = vsel %vm546, %v1160, 0
      %v1174 = vsel %vm550, %v1168, 0
      %v1177 = vsel %vm550, %v1169, 0
      %v1180 = vsel %vm550, %v1166, 0
      %1182 = vmatprep.subr.bf16.mxu0 %v1177
      %1183 = vmatpush1.bf16.msra.mxu0 %v1174
      %1184 = vmatprep.subr.bf16.mxu0 0
      %1185 = vmatpush1.bf16.msra.mxu0 0
      %1186 = vmatprep.subr.bf16.mxu0 0
      %1187 = vmatpush1.bf16.msra.mxu0 0
      %1188 = vmatprep.subr.bf16.mxu0 0
      %1189 = vmatpush1.bf16.msra.mxu0 0
      %1190 = vmatprep.subr.bf16.mxu0 0
      %1191 = vmatpush1.bf16.msra.mxu0 0
      %1192 = vmatprep.subr.bf16.mxu0 0
      %1193 = vmatpush1.bf16.msra.mxu0 0
      %1194 = vmatprep.subr.bf16.mxu0 0
      %1195 = vmatpush1.bf16.msra.mxu0 0
      %1196 = vmatprep.subr.bf16.mxu0 0
      %1197 = vmatpush1.bf16.msra.mxu0 0
      %1198 = vmatprep.subr.bf16.mxu0 0
      %1199 = vmatpush1.bf16.msra.mxu0 0
      %1200 = vmatprep.subr.bf16.mxu0 0
      %1201 = vmatpush1.bf16.msra.mxu0 0
      %1202 = vmatprep.subr.bf16.mxu0 0
      %1203 = vmatpush1.bf16.msra.mxu0 0
      %1204 = vmatprep.subr.bf16.mxu0 0
      %1205 = vmatpush1.bf16.msra.mxu0 0
      %1206 = vmatprep.subr.bf16.mxu0 0
      %1207 = vmatpush1.bf16.msra.mxu0 0
      %1208 = vmatprep.subr.bf16.mxu0 0
      %1209 = vmatpush1.bf16.msra.mxu0 0
      %1210 = vmatprep.subr.bf16.mxu0 0
      %1211 = vmatpush1.bf16.msra.mxu0 0
      %1212 = vmatprep.subr.bf16.mxu0 0
      %1213 = vmatpush1.bf16.msra.mxu0 0
      %1214 = vmatprep.mubr.bf16.mxu0 0
      %1215 = vmatmul.mubr.bf16.gmra.mrb[0].mxu0 %v1171
      %v1216 = vpop.f32.mrb[0].mxu0
      %v1217 = vadd.f32 0.0, %v1216
      %v1218 = vpop.f32.mrb[0].mxu0
      %v1219 = vadd.f32 0.0, %v1218
      %v1220 = vpop.f32.mrb[0].mxu0
      %v1221 = vpop.f32.mrb[0].mxu0
      %1222 = vdwg.mxu0
      %1223 = vmatprep.subr.bf16.mxu0 0
      %1224 = vmatpush1.bf16.msra.mxu0 %v1180
      %1225 = vmatprep.subr.bf16.mxu0 0
      %1226 = vmatpush1.bf16.msra.mxu0 0
      %1227 = vmatprep.subr.bf16.mxu0 0
      %1228 = vmatpush1.bf16.msra.mxu0 0
      %1229 = vmatprep.subr.bf16.mxu0 0
      %1230 = vmatpush1.bf16.msra.mxu0 0
      %1231 = vmatprep.subr.bf16.mxu0 0
      %1232 = vmatpush1.bf16.msra.mxu0 0
      %1233 = vmatprep.subr.bf16.mxu0 0
      %1234 = vmatpush1.bf16.msra.mxu0 0
      %1235 = vmatprep.subr.bf16.mxu0 0
      %1236 = vmatpush1.bf16.msra.mxu0 0
      %1237 = vmatprep.subr.bf16.mxu0 0
      %1238 = vmatpush1.bf16.msra.mxu0 0
      %1239 = vmatprep.subr.bf16.mxu0 0
      %1240 = vmatpush1.bf16.msra.mxu0 0
      %1241 = vmatprep.subr.bf16.mxu0 0
      %1242 = vmatpush1.bf16.msra.mxu0 0
      %1243 = vmatprep.subr.bf16.mxu0 0
      %1244 = vmatpush1.bf16.msra.mxu0 0
      %1245 = vmatprep.subr.bf16.mxu0 0
      %1246 = vmatpush1.bf16.msra.mxu0 0
      %1247 = vmatprep.subr.bf16.mxu0 0
      %1248 = vmatpush1.bf16.msra.mxu0 0
      %1249 = vmatprep.subr.bf16.mxu0 0
      %1250 = vmatpush1.bf16.msra.mxu0 0
      %1251 = vmatprep.subr.bf16.mxu0 0
      %1252 = vmatpush1.bf16.msra.mxu0 0
      %1253 = vmatprep.subr.bf16.mxu0 0
      %1254 = vmatpush1.bf16.msra.mxu0 0
      %1255 = vmatprep.mubr.bf16.mxu0 0
      %1256 = vmatmul.mubr.bf16.gmra.mrb[0].mxu0 %v1171
      %v1257 = vpop.f32.mrb[0].mxu0
      %v1258 = vadd.f32 0.0, %v1257
      %v1259 = vpop.f32.mrb[0].mxu0
      %v1260 = vpop.f32.mrb[0].mxu0
      %v1261 = vpop.f32.mrb[0].mxu0
      %1262 = vdwg.mxu0
      %v1263 = vadd.f32 %v1156, %v1217
      %v1264 = vadd.f32 %v1157, %v1219
      %v1265 = vadd.f32 %v1158, %v1258
      %s1266 = scalar_lea.vmem %s3, 28
      %v1267 = vld [vmem:[%s1266] sm:$0xf]
      %1268 = vrot.lane.b32.xlu0 %v524, 91
      %v1269 = vpop.permute.xlu0 %1268
      %1270 = vrot.lane.b32.xlu0 %v527, 91
      %v1271 = vpop.permute.xlu0 %1270
      %1272 = vrot.lane.b32.xlu0 %v530, 91
      %v1273 = vpop.permute.xlu0 %1272
      %vm1274 = vcmask 744448
      %v1275 = vsel %vm1274, %v1269, %v1271
      %v1276 = vsel %vm1274, %v1271, %v1273
      %v1278 = vsel %vm546, %v1267, 0
      %v1281 = vsel %vm550, %v1275, 0
      %v1284 = vsel %vm550, %v1276, 0
      %v1287 = vsel %vm550, %v1273, 0
      %1289 = vmatprep.subr.bf16.mxu0 %v1284
      %1290 = vmatpush1.bf16.msra.mxu0 %v1281
      %1291 = vmatprep.subr.bf16.mxu0 0
      %1292 = vmatpush1.bf16.msra.mxu0 0
      %1293 = vmatprep.subr.bf16.mxu0 0
      %1294 = vmatpush1.bf16.msra.mxu0 0
      %1295 = vmatprep.subr.bf16.mxu0 0
      %1296 = vmatpush1.bf16.msra.mxu0 0
      %1297 = vmatprep.subr.bf16.mxu0 0
      %1298 = vmatpush1.bf16.msra.mxu0 0
      %1299 = vmatprep.subr.bf16.mxu0 0
      %1300 = vmatpush1.bf16.msra.mxu0 0
      %1301 = vmatprep.subr.bf16.mxu0 0
      %1302 = vmatpush1.bf16.msra.mxu0 0
      %1303 = vmatprep.subr.bf16.mxu0 0
      %1304 = vmatpush1.bf16.msra.mxu0 0
      %1305 = vmatprep.subr.bf16.mxu0 0
      %1306 = vmatpush1.bf16.msra.mxu0 0
      %1307 = vmatprep.subr.bf16.mxu0 0
      %1308 = vmatpush1.bf16.msra.mxu0 0
      %1309 = vmatprep.subr.bf16.mxu0 0
      %1310 = vmatpush1.bf16.msra.mxu0 0
      %1311 = vmatprep.subr.bf16.mxu0 0
      %1312 = vmatpush1.bf16.msra.mxu0 0
      %1313 = vmatprep.subr.bf16.mxu0 0
      %1314 = vmatpush1.bf16.msra.mxu0 0
      %1315 = vmatprep.subr.bf16.mxu0 0
      %1316 = vmatpush1.bf16.msra.mxu0 0
      %1317 = vmatprep.subr.bf16.mxu0 0
      %1318 = vmatpush1.bf16.msra.mxu0 0
      %1319 = vmatprep.subr.bf16.mxu0 0
      %1320 = vmatpush1.bf16.msra.mxu0 0
      %1321 = vmatprep.mubr.bf16.mxu0 0
      %1322 = vmatmul.mubr.bf16.gmra.mrb[0].mxu0 %v1278
      %v1323 = vpop.f32.mrb[0].mxu0
      %v1324 = vadd.f32 0.0, %v1323
      %v1325 = vpop.f32.mrb[0].mxu0
      %v1326 = vadd.f32 0.0, %v1325
      %v1327 = vpop.f32.mrb[0].mxu0
      %v1328 = vpop.f32.mrb[0].mxu0
      %1329 = vdwg.mxu0
      %1330 = vmatprep.subr.bf16.mxu0 0
      %1331 = vmatpush1.bf16.msra.mxu0 %v1287
      %1332 = vmatprep.subr.bf16.mxu0 0
      %1333 = vmatpush1.bf16.msra.mxu0 0
      %1334 = vmatprep.subr.bf16.mxu0 0
      %1335 = vmatpush1.bf16.msra.mxu0 0
      %1336 = vmatprep.subr.bf16.mxu0 0
      %1337 = vmatpush1.bf16.msra.mxu0 0
      %1338 = vmatprep.subr.bf16.mxu0 0
      %1339 = vmatpush1.bf16.msra.mxu0 0
      %1340 = vmatprep.subr.bf16.mxu0 0
      %1341 = vmatpush1.bf16.msra.mxu0 0
      %1342 = vmatprep.subr.bf16.mxu0 0
      %1343 = vmatpush1.bf16.msra.mxu0 0
      %1344 = vmatprep.subr.bf16.mxu0 0
      %1345 = vmatpush1.bf16.msra.mxu0 0
      %1346 = vmatprep.subr.bf16.mxu0 0
      %1347 = vmatpush1.bf16.msra.mxu0 0
      %1348 = vmatprep.subr.bf16.mxu0 0
      %1349 = vmatpush1.bf16.msra.mxu0 0
      %1350 = vmatprep.subr.bf16.mxu0 0
      %1351 = vmatpush1.bf16.msra.mxu0 0
      %1352 = vmatprep.subr.bf16.mxu0 0
      %1353 = vmatpush1.bf16.msra.mxu0 0
      %1354 = vmatprep.subr.bf16.mxu0 0
      %1355 = vmatpush1.bf16.msra.mxu0 0
      %1356 = vmatprep.subr.bf16.mxu0 0
      %1357 = vmatpush1.bf16.msra.mxu0 0
      %1358 = vmatprep.subr.bf16.mxu0 0
      %1359 = vmatpush1.bf16.msra.mxu0 0
      %1360 = vmatprep.subr.bf16.mxu0 0
      %1361 = vmatpush1.bf16.msra.mxu0 0
      %1362 = vmatprep.mubr.bf16.mxu0 0
      %1363 = vmatmul.mubr.bf16.gmra.mrb[0].mxu0 %v1278
      %v1364 = vpop.f32.mrb[0].mxu0
      %v1365 = vadd.f32 0.0, %v1364
      %v1366 = vpop.f32.mrb[0].mxu0
      %v1367 = vpop.f32.mrb[0].mxu0
      %v1368 = vpop.f32.mrb[0].mxu0
      %1369 = vdwg.mxu0
      %v1370 = vadd.f32 %v1263, %v1324
      %v1371 = vadd.f32 %v1264, %v1326
      %v1372 = vadd.f32 %v1265, %v1365
      %s1373 = scalar_lea.vmem %s3, 32
      %v1374 = vld [vmem:[%s1373] sm:$0xf]
      %1375 = vrot.lane.b32.xlu0 %v524, 90
      %v1376 = vpop.permute.xlu0 %1375
      %1377 = vrot.lane.b32.xlu0 %v527, 90
      %v1378 = vpop.permute.xlu0 %1377
      %1379 = vrot.lane.b32.xlu0 %v530, 90
      %v1380 = vpop.permute.xlu0 %1379
      %vm1381 = vcmask 736256
      %v1382 = vsel %vm1381, %v1376, %v1378
      %v1383 = vsel %vm1381, %v1378, %v1380
      %v1385 = vsel %vm546, %v1374, 0
      %v1388 = vsel %vm550, %v1382, 0
      %v1391 = vsel %vm550, %v1383, 0
      %v1394 = vsel %vm550, %v1380, 0
      %1396 = vmatprep.subr.bf16.mxu0 %v1391
      %1397 = vmatpush1.bf16.msra.mxu0 %v1388
      %1398 = vmatprep.subr.bf16.mxu0 0
      %1399 = vmatpush1.bf16.msra.mxu0 0
      %1400 = vmatprep.subr.bf16.mxu0 0
      %1401 = vmatpush1.bf16.msra.mxu0 0
      %1402 = vmatprep.subr.bf16.mxu0 0
      %1403 = vmatpush1.bf16.msra.mxu0 0
      %1404 = vmatprep.subr.bf16.mxu0 0
      %1405 = vmatpush1.bf16.msra.mxu0 0
      %1406 = vmatprep.subr.bf16.mxu0 0
      %1407 = vmatpush1.bf16.msra.mxu0 0
      %1408 = vmatprep.subr.bf16.mxu0 0
      %1409 = vmatpush1.bf16.msra.mxu0 0
      %1410 = vmatprep.subr.bf16.mxu0 0
      %1411 = vmatpush1.bf16.msra.mxu0 0
      %1412 = vmatprep.subr.bf16.mxu0 0
      %1413 = vmatpush1.bf16.msra.mxu0 0
      %1414 = vmatprep.subr.bf16.mxu0 0
      %1415 = vmatpush1.bf16.msra.mxu0 0
      %1416 = vmatprep.subr.bf16.mxu0 0
      %1417 = vmatpush1.bf16.msra.mxu0 0
      %1418 = vmatprep.subr.bf16.mxu0 0
      %1419 = vmatpush1.bf16.msra.mxu0 0
      %1420 = vmatprep.subr.bf16.mxu0 0
      %1421 = vmatpush1.bf16.msra.mxu0 0
      %1422 = vmatprep.subr.bf16.mxu0 0
      %1423 = vmatpush1.bf16.msra.mxu0 0
      %1424 = vmatprep.subr.bf16.mxu0 0
      %1425 = vmatpush1.bf16.msra.mxu0 0
      %1426 = vmatprep.subr.bf16.mxu0 0
      %1427 = vmatpush1.bf16.msra.mxu0 0
      %1428 = vmatprep.mubr.bf16.mxu0 0
      %1429 = vmatmul.mubr.bf16.gmra.mrb[0].mxu0 %v1385
      %v1430 = vpop.f32.mrb[0].mxu0
      %v1431 = vadd.f32 0.0, %v1430
      %v1432 = vpop.f32.mrb[0].mxu0
      %v1433 = vadd.f32 0.0, %v1432
      %v1434 = vpop.f32.mrb[0].mxu0
      %v1435 = vpop.f32.mrb[0].mxu0
      %1436 = vdwg.mxu0
      %1437 = vmatprep.subr.bf16.mxu0 0
      %1438 = vmatpush1.bf16.msra.mxu0 %v1394
      %1439 = vmatprep.subr.bf16.mxu0 0
      %1440 = vmatpush1.bf16.msra.mxu0 0
      %1441 = vmatprep.subr.bf16.mxu0 0
      %1442 = vmatpush1.bf16.msra.mxu0 0
      %1443 = vmatprep.subr.bf16.mxu0 0
      %1444 = vmatpush1.bf16.msra.mxu0 0
      %1445 = vmatprep.subr.bf16.mxu0 0
      %1446 = vmatpush1.bf16.msra.mxu0 0
      %1447 = vmatprep.subr.bf16.mxu0 0
      %1448 = vmatpush1.bf16.msra.mxu0 0
      %1449 = vmatprep.subr.bf16.mxu0 0
      %1450 = vmatpush1.bf16.msra.mxu0 0
      %1451 = vmatprep.subr.bf16.mxu0 0
      %1452 = vmatpush1.bf16.msra.mxu0 0
      %1453 = vmatprep.subr.bf16.mxu0 0
      %1454 = vmatpush1.bf16.msra.mxu0 0
      %1455 = vmatprep.subr.bf16.mxu0 0
      %1456 = vmatpush1.bf16.msra.mxu0 0
      %1457 = vmatprep.subr.bf16.mxu0 0
      %1458 = vmatpush1.bf16.msra.mxu0 0
      %1459 = vmatprep.subr.bf16.mxu0 0
      %1460 = vmatpush1.bf16.msra.mxu0 0
      %1461 = vmatprep.subr.bf16.mxu0 0
      %1462 = vmatpush1.bf16.msra.mxu0 0
      %1463 = vmatprep.subr.bf16.mxu0 0
      %1464 = vmatpush1.bf16.msra.mxu0 0
      %1465 = vmatprep.subr.bf16.mxu0 0
      %1466 = vmatpush1.bf16.msra.mxu0 0
      %1467 = vmatprep.subr.bf16.mxu0 0
      %1468 = vmatpush1.bf16.msra.mxu0 0
      %1469 = vmatprep.mubr.bf16.mxu0 0
      %1470 = vmatmul.mubr.bf16.gmra.mrb[0].mxu0 %v1385
      %v1471 = vpop.f32.mrb[0].mxu0
      %v1472 = vadd.f32 0.0, %v1471
      %v1473 = vpop.f32.mrb[0].mxu0
      %v1474 = vpop.f32.mrb[0].mxu0
      %v1475 = vpop.f32.mrb[0].mxu0
      %1476 = vdwg.mxu0
      %v1477 = vadd.f32 %v1370, %v1431
      %v1478 = vadd.f32 %v1371, %v1433
      %v1479 = vadd.f32 %v1372, %v1472
      %v1480 = vld [vmem:[%s4] sm:$0xff]
      %1482 = vset.pattern.permute.xlu0 0
      %1483 = vperm.xlu0 %1482, %v1480
      %v1484 = vpop.permute.xlu0 %1483
      %v1486 = vadd.f32 %v1477, %v1484
      %v1487 = vadd.f32 %v1478, %v1484
      %v1488 = vadd.f32 %v1479, %v1484
      %v1489 = vmax.f32 %v1486, 0.0
      %v1490 = vmax.f32 %v1487, 0.0
      %v1491 = vmax.f32 %v1488, 0.0
      %v1492 = vld [vmem:[%s7] sm:$0x7]
      %v1494 = vlaneseq
      %v1495 = vshrl.u32 %v1494, 7
      %v1496 = vsub.s32 0, %v1495
      %v1497 = vrot.slane %v1492, %v1496
      %v1498 = vlaneseq
      %v1499 = vshrl.u32 %v1498, 7
      %v1500 = vsub.s32 1, %v1499
      %v1501 = vrot.slane %v1492, %v1500
      %v1502 = vlaneseq
      %v1503 = vshrl.u32 %v1502, 7
      %v1504 = vsub.s32 2, %v1503
      %v1505 = vrot.slane %v1492, %v1504
      %v1509 = vmul.f32 %v1489, %v1497
      %v1510 = vmul.f32 %v1490, %v1501
      %v1511 = vmul.f32 %v1491, %v1505
      %v1512 = vpack.c.bf16 %v1509, %v1509
      %v1513 = vpack.c.bf16 %v1510, %v1510
      %v1514 = vpack.c.bf16 %v1511, %v1511
      %1518 = vrot.lane.b32.xlu0 %v1512, 19
      %v1519 = vpop.permute.xlu0 %1518
      %1520 = vrot.lane.b32.xlu0 %v1513, 19
      %v1521 = vpop.permute.xlu0 %1520
      %1522 = vrot.lane.b32.xlu0 %v1514, 19
      %v1523 = vpop.permute.xlu0 %1522
      %vm1524 = vcmask 154624
      %v1525 = vsel %vm1524, %v1519, %v1521
      %v1526 = vsel %vm1524, %v1521, %v1523
      %vm1527 = vcmask 154624
      %v1530 = vsel %vm1527, 0, %v1519
      %vm1531 = vcmask 416768
      %v1533 = vsel %vm1531, %v1526, 0
      %v1534 = vld [vmem:[%s5] sm:$0xf]
      %s1535 = scalar_lea.vmem %s5, 4
      %v1536 = vld [vmem:[%s1535] sm:$0xf]
      %1539 = vrot.lane.b32.xlu0 %v1530, 127
      %v1540 = vpop.permute.xlu0 %1539
      %1541 = vrot.lane.b32.xlu0 %v1525, 127
      %v1542 = vpop.permute.xlu0 %1541
      %1543 = vrot.lane.b32.xlu0 %v1533, 127
      %v1544 = vpop.permute.xlu0 %1543
      %v1545 = vsel %vm543, %v1540, %v1542
      %v1546 = vsel %vm543, %v1542, %v1544
      %v1548 = vsel %vm546, %v1536, 0
      %v1551 = vsel %vm550, %v1545, 0
      %v1554 = vsel %vm550, %v1546, 0
      %v1557 = vsel %vm550, %v1544, 0
      %1559 = vmatprep.subr.bf16.mxu0 %v1554
      %1560 = vmatpush1.bf16.msra.mxu0 %v1551
      %1561 = vmatprep.subr.bf16.mxu0 0
      %1562 = vmatpush1.bf16.msra.mxu0 0
      %1563 = vmatprep.subr.bf16.mxu0 0
      %1564 = vmatpush1.bf16.msra.mxu0 0
      %1565 = vmatprep.subr.bf16.mxu0 0
      %1566 = vmatpush1.bf16.msra.mxu0 0
      %1567 = vmatprep.subr.bf16.mxu0 0
      %1568 = vmatpush1.bf16.msra.mxu0 0
      %1569 = vmatprep.subr.bf16.mxu0 0
      %1570 = vmatpush1.bf16.msra.mxu0 0
      %1571 = vmatprep.subr.bf16.mxu0 0
      %1572 = vmatpush1.bf16.msra.mxu0 0
      %1573 = vmatprep.subr.bf16.mxu0 0
      %1574 = vmatpush1.bf16.msra.mxu0 0
      %1575 = vmatprep.subr.bf16.mxu0 0
      %1576 = vmatpush1.bf16.msra.mxu0 0
      %1577 = vmatprep.subr.bf16.mxu0 0
      %1578 = vmatpush1.bf16.msra.mxu0 0
      %1579 = vmatprep.subr.bf16.mxu0 0
      %1580 = vmatpush1.bf16.msra.mxu0 0
      %1581 = vmatprep.subr.bf16.mxu0 0
      %1582 = vmatpush1.bf16.msra.mxu0 0
      %1583 = vmatprep.subr.bf16.mxu0 0
      %1584 = vmatpush1.bf16.msra.mxu0 0
      %1585 = vmatprep.subr.bf16.mxu0 0
      %1586 = vmatpush1.bf16.msra.mxu0 0
      %1587 = vmatprep.subr.bf16.mxu0 0
      %1588 = vmatpush1.bf16.msra.mxu0 0
      %1589 = vmatprep.subr.bf16.mxu0 0
      %1590 = vmatpush1.bf16.msra.mxu0 0
      %1591 = vmatprep.mubr.bf16.mxu0 0
      %1592 = vmatmul.mubr.bf16.gmra.mrb[0].mxu0 %v1548
      %v1593 = vpop.f32.mrb[0].mxu0
      %v1594 = vadd.f32 0.0, %v1593
      %v1595 = vpop.f32.mrb[0].mxu0
      %v1596 = vadd.f32 0.0, %v1595
      %v1597 = vpop.f32.mrb[0].mxu0
      %v1598 = vpop.f32.mrb[0].mxu0
      %1599 = vdwg.mxu0
      %1600 = vmatprep.subr.bf16.mxu0 0
      %1601 = vmatpush1.bf16.msra.mxu0 %v1557
      %1602 = vmatprep.subr.bf16.mxu0 0
      %1603 = vmatpush1.bf16.msra.mxu0 0
      %1604 = vmatprep.subr.bf16.mxu0 0
      %1605 = vmatpush1.bf16.msra.mxu0 0
      %1606 = vmatprep.subr.bf16.mxu0 0
      %1607 = vmatpush1.bf16.msra.mxu0 0
      %1608 = vmatprep.subr.bf16.mxu0 0
      %1609 = vmatpush1.bf16.msra.mxu0 0
      %1610 = vmatprep.subr.bf16.mxu0 0
      %1611 = vmatpush1.bf16.msra.mxu0 0
      %1612 = vmatprep.subr.bf16.mxu0 0
      %1613 = vmatpush1.bf16.msra.mxu0 0
      %1614 = vmatprep.subr.bf16.mxu0 0
      %1615 = vmatpush1.bf16.msra.mxu0 0
      %1616 = vmatprep.subr.bf16.mxu0 0
      %1617 = vmatpush1.bf16.msra.mxu0 0
      %1618 = vmatprep.subr.bf16.mxu0 0
      %1619 = vmatpush1.bf16.msra.mxu0 0
      %1620 = vmatprep.subr.bf16.mxu0 0
      %1621 = vmatpush1.bf16.msra.mxu0 0
      %1622 = vmatprep.subr.bf16.mxu0 0
      %1623 = vmatpush1.bf16.msra.mxu0 0
      %1624 = vmatprep.subr.bf16.mxu0 0
      %1625 = vmatpush1.bf16.msra.mxu0 0
      %1626 = vmatprep.subr.bf16.mxu0 0
      %1627 = vmatpush1.bf16.msra.mxu0 0
      %1628 = vmatprep.subr.bf16.mxu0 0
      %1629 = vmatpush1.bf16.msra.mxu0 0
      %1630 = vmatprep.subr.bf16.mxu0 0
      %1631 = vmatpush1.bf16.msra.mxu0 0
      %1632 = vmatprep.mubr.bf16.mxu0 0
      %1633 = vmatmul.mubr.bf16.gmra.mrb[0].mxu0 %v1548
      %v1634 = vpop.f32.mrb[0].mxu0
      %v1635 = vadd.f32 0.0, %v1634
      %v1636 = vpop.f32.mrb[0].mxu0
      %v1637 = vpop.f32.mrb[0].mxu0
      %v1638 = vpop.f32.mrb[0].mxu0
      %1639 = vdwg.mxu0
      %v1641 = vsel %vm546, %v1534, 0
      %v1643 = vsel %vm550, %v1530, 0
      %v1646 = vsel %vm550, %v1525, 0
      %v1648 = vsel %vm550, %v1533, 0
      %1650 = vmatprep.subr.bf16.mxu0 %v1646
      %1651 = vmatpush1.bf16.msra.mxu0 %v1643
      %1652 = vmatprep.subr.bf16.mxu0 0
      %1653 = vmatpush1.bf16.msra.mxu0 0
      %1654 = vmatprep.subr.bf16.mxu0 0
      %1655 = vmatpush1.bf16.msra.mxu0 0
      %1656 = vmatprep.subr.bf16.mxu0 0
      %1657 = vmatpush1.bf16.msra.mxu0 0
      %1658 = vmatprep.subr.bf16.mxu0 0
      %1659 = vmatpush1.bf16.msra.mxu0 0
      %1660 = vmatprep.subr.bf16.mxu0 0
      %1661 = vmatpush1.bf16.msra.mxu0 0
      %1662 = vmatprep.subr.bf16.mxu0 0
      %1663 = vmatpush1.bf16.msra.mxu0 0
      %1664 = vmatprep.subr.bf16.mxu0 0
      %1665 = vmatpush1.bf16.msra.mxu0 0
      %1666 = vmatprep.subr.bf16.mxu0 0
      %1667 = vmatpush1.bf16.msra.mxu0 0
      %1668 = vmatprep.subr.bf16.mxu0 0
      %1669 = vmatpush1.bf16.msra.mxu0 0
      %1670 = vmatprep.subr.bf16.mxu0 0
      %1671 = vmatpush1.bf16.msra.mxu0 0
      %1672 = vmatprep.subr.bf16.mxu0 0
      %1673 = vmatpush1.bf16.msra.mxu0 0
      %1674 = vmatprep.subr.bf16.mxu0 0
      %1675 = vmatpush1.bf16.msra.mxu0 0
      %1676 = vmatprep.subr.bf16.mxu0 0
      %1677 = vmatpush1.bf16.msra.mxu0 0
      %1678 = vmatprep.subr.bf16.mxu0 0
      %1679 = vmatpush1.bf16.msra.mxu0 0
      %1680 = vmatprep.subr.bf16.mxu0 0
      %1681 = vmatpush1.bf16.msra.mxu0 0
      %1682 = vmatprep.mubr.bf16.mxu0 0
      %1683 = vmatmul.mubr.bf16.gmra.mrb[0].mxu0 %v1641
      %v1684 = vpop.f32.mrb[0].mxu0
      %v1685 = vadd.f32 %v1594, %v1684
      %v1686 = vpop.f32.mrb[0].mxu0
      %v1687 = vadd.f32 %v1596, %v1686
      %v1688 = vpop.f32.mrb[0].mxu0
      %v1689 = vpop.f32.mrb[0].mxu0
      %1690 = vdwg.mxu0
      %1691 = vmatprep.subr.bf16.mxu0 0
      %1692 = vmatpush1.bf16.msra.mxu0 %v1648
      %1693 = vmatprep.subr.bf16.mxu0 0
      %1694 = vmatpush1.bf16.msra.mxu0 0
      %1695 = vmatprep.subr.bf16.mxu0 0
      %1696 = vmatpush1.bf16.msra.mxu0 0
      %1697 = vmatprep.subr.bf16.mxu0 0
      %1698 = vmatpush1.bf16.msra.mxu0 0
      %1699 = vmatprep.subr.bf16.mxu0 0
      %1700 = vmatpush1.bf16.msra.mxu0 0
      %1701 = vmatprep.subr.bf16.mxu0 0
      %1702 = vmatpush1.bf16.msra.mxu0 0
      %1703 = vmatprep.subr.bf16.mxu0 0
      %1704 = vmatpush1.bf16.msra.mxu0 0
      %1705 = vmatprep.subr.bf16.mxu0 0
      %1706 = vmatpush1.bf16.msra.mxu0 0
      %1707 = vmatprep.subr.bf16.mxu0 0
      %1708 = vmatpush1.bf16.msra.mxu0 0
      %1709 = vmatprep.subr.bf16.mxu0 0
      %1710 = vmatpush1.bf16.msra.mxu0 0
      %1711 = vmatprep.subr.bf16.mxu0 0
      %1712 = vmatpush1.bf16.msra.mxu0 0
      %1713 = vmatprep.subr.bf16.mxu0 0
      %1714 = vmatpush1.bf16.msra.mxu0 0
      %1715 = vmatprep.subr.bf16.mxu0 0
      %1716 = vmatpush1.bf16.msra.mxu0 0
      %1717 = vmatprep.subr.bf16.mxu0 0
      %1718 = vmatpush1.bf16.msra.mxu0 0
      %1719 = vmatprep.subr.bf16.mxu0 0
      %1720 = vmatpush1.bf16.msra.mxu0 0
      %1721 = vmatprep.subr.bf16.mxu0 0
      %1722 = vmatpush1.bf16.msra.mxu0 0
      %1723 = vmatprep.mubr.bf16.mxu0 0
      %1724 = vmatmul.mubr.bf16.gmra.mrb[0].mxu0 %v1641
      %v1725 = vpop.f32.mrb[0].mxu0
      %v1726 = vadd.f32 %v1635, %v1725
      %v1727 = vpop.f32.mrb[0].mxu0
      %v1728 = vpop.f32.mrb[0].mxu0
      %v1729 = vpop.f32.mrb[0].mxu0
      %1730 = vdwg.mxu0
      %s1731 = scalar_lea.vmem %s5, 8
      %v1732 = vld [vmem:[%s1731] sm:$0xf]
      %1733 = vrot.lane.b32.xlu0 %v1530, 126
      %v1734 = vpop.permute.xlu0 %1733
      %1735 = vrot.lane.b32.xlu0 %v1525, 126
      %v1736 = vpop.permute.xlu0 %1735
      %1737 = vrot.lane.b32.xlu0 %v1533, 126
      %v1738 = vpop.permute.xlu0 %1737
      %v1739 = vsel %vm739, %v1734, %v1736
      %v1740 = vsel %vm739, %v1736, %v1738
      %v1742 = vsel %vm546, %v1732, 0
      %v1745 = vsel %vm550, %v1739, 0
      %v1748 = vsel %vm550, %v1740, 0
      %v1751 = vsel %vm550, %v1738, 0
      %1753 = vmatprep.subr.bf16.mxu0 %v1748
      %1754 = vmatpush1.bf16.msra.mxu0 %v1745
      %1755 = vmatprep.subr.bf16.mxu0 0
      %1756 = vmatpush1.bf16.msra.mxu0 0
      %1757 = vmatprep.subr.bf16.mxu0 0
      %1758 = vmatpush1.bf16.msra.mxu0 0
      %1759 = vmatprep.subr.bf16.mxu0 0
      %1760 = vmatpush1.bf16.msra.mxu0 0
      %1761 = vmatprep.subr.bf16.mxu0 0
      %1762 = vmatpush1.bf16.msra.mxu0 0
      %1763 = vmatprep.subr.bf16.mxu0 0
      %1764 = vmatpush1.bf16.msra.mxu0 0
      %1765 = vmatprep.subr.bf16.mxu0 0
      %1766 = vmatpush1.bf16.msra.mxu0 0
      %1767 = vmatprep.subr.bf16.mxu0 0
      %1768 = vmatpush1.bf16.msra.mxu0 0
      %1769 = vmatprep.subr.bf16.mxu0 0
      %1770 = vmatpush1.bf16.msra.mxu0 0
      %1771 = vmatprep.subr.bf16.mxu0 0
      %1772 = vmatpush1.bf16.msra.mxu0 0
      %1773 = vmatprep.subr.bf16.mxu0 0
      %1774 = vmatpush1.bf16.msra.mxu0 0
      %1775 = vmatprep.subr.bf16.mxu0 0
      %1776 = vmatpush1.bf16.msra.mxu0 0
      %1777 = vmatprep.subr.bf16.mxu0 0
      %1778 = vmatpush1.bf16.msra.mxu0 0
      %1779 = vmatprep.subr.bf16.mxu0 0
      %1780 = vmatpush1.bf16.msra.mxu0 0
      %1781 = vmatprep.subr.bf16.mxu0 0
      %1782 = vmatpush1.bf16.msra.mxu0 0
      %1783 = vmatprep.subr.bf16.mxu0 0
      %1784 = vmatpush1.bf16.msra.mxu0 0
      %1785 = vmatprep.mubr.bf16.mxu0 0
      %1786 = vmatmul.mubr.bf16.gmra.mrb[0].mxu0 %v1742
      %v1787 = vpop.f32.mrb[0].mxu0
      %v1788 = vadd.f32 0.0, %v1787
      %v1789 = vpop.f32.mrb[0].mxu0
      %v1790 = vadd.f32 0.0, %v1789
      %v1791 = vpop.f32.mrb[0].mxu0
      %v1792 = vpop.f32.mrb[0].mxu0
      %1793 = vdwg.mxu0
      %1794 = vmatprep.subr.bf16.mxu0 0
      %1795 = vmatpush1.bf16.msra.mxu0 %v1751
      %1796 = vmatprep.subr.bf16.mxu0 0
      %1797 = vmatpush1.bf16.msra.mxu0 0
      %1798 = vmatprep.subr.bf16.mxu0 0
      %1799 = vmatpush1.bf16.msra.mxu0 0
      %1800 = vmatprep.subr.bf16.mxu0 0
      %1801 = vmatpush1.bf16.msra.mxu0 0
      %1802 = vmatprep.subr.bf16.mxu0 0
      %1803 = vmatpush1.bf16.msra.mxu0 0
      %1804 = vmatprep.subr.bf16.mxu0 0
      %1805 = vmatpush1.bf16.msra.mxu0 0
      %1806 = vmatprep.subr.bf16.mxu0 0
      %1807 = vmatpush1.bf16.msra.mxu0 0
      %1808 = vmatprep.subr.bf16.mxu0 0
      %1809 = vmatpush1.bf16.msra.mxu0 0
      %1810 = vmatprep.subr.bf16.mxu0 0
      %1811 = vmatpush1.bf16.msra.mxu0 0
      %1812 = vmatprep.subr.bf16.mxu0 0
      %1813 = vmatpush1.bf16.msra.mxu0 0
      %1814 = vmatprep.subr.bf16.mxu0 0
      %1815 = vmatpush1.bf16.msra.mxu0 0
      %1816 = vmatprep.subr.bf16.mxu0 0
      %1817 = vmatpush1.bf16.msra.mxu0 0
      %1818 = vmatprep.subr.bf16.mxu0 0
      %1819 = vmatpush1.bf16.msra.mxu0 0
      %1820 = vmatprep.subr.bf16.mxu0 0
      %1821 = vmatpush1.bf16.msra.mxu0 0
      %1822 = vmatprep.subr.bf16.mxu0 0
      %1823 = vmatpush1.bf16.msra.mxu0 0
      %1824 = vmatprep.subr.bf16.mxu0 0
      %1825 = vmatpush1.bf16.msra.mxu0 0
      %1826 = vmatprep.mubr.bf16.mxu0 0
      %1827 = vmatmul.mubr.bf16.gmra.mrb[0].mxu0 %v1742
      %v1828 = vpop.f32.mrb[0].mxu0
      %v1829 = vadd.f32 0.0, %v1828
      %v1830 = vpop.f32.mrb[0].mxu0
      %v1831 = vpop.f32.mrb[0].mxu0
      %v1832 = vpop.f32.mrb[0].mxu0
      %1833 = vdwg.mxu0
      %v1834 = vadd.f32 %v1685, %v1788
      %v1835 = vadd.f32 %v1687, %v1790
      %v1836 = vadd.f32 %v1726, %v1829
      %s1837 = scalar_lea.vmem %s5, 12
      %v1838 = vld [vmem:[%s1837] sm:$0xf]
      %1839 = vrot.lane.b32.xlu0 %v1530, 110
      %v1840 = vpop.permute.xlu0 %1839
      %1841 = vrot.lane.b32.xlu0 %v1525, 110
      %v1842 = vpop.permute.xlu0 %1841
      %1843 = vrot.lane.b32.xlu0 %v1533, 110
      %v1844 = vpop.permute.xlu0 %1843
      %v1845 = vsel %vm846, %v1840, %v1842
      %v1846 = vsel %vm846, %v1842, %v1844
      %v1848 = vsel %vm546, %v1838, 0
      %v1851 = vsel %vm550, %v1845, 0
      %v1854 = vsel %vm550, %v1846, 0
      %v1857 = vsel %vm550, %v1844, 0
      %1859 = vmatprep.subr.bf16.mxu0 %v1854
      %1860 = vmatpush1.bf16.msra.mxu0 %v1851
      %1861 = vmatprep.subr.bf16.mxu0 0
      %1862 = vmatpush1.bf16.msra.mxu0 0
      %1863 = vmatprep.subr.bf16.mxu0 0
      %1864 = vmatpush1.bf16.msra.mxu0 0
      %1865 = vmatprep.subr.bf16.mxu0 0
      %1866 = vmatpush1.bf16.msra.mxu0 0
      %1867 = vmatprep.subr.bf16.mxu0 0
      %1868 = vmatpush1.bf16.msra.mxu0 0
      %1869 = vmatprep.subr.bf16.mxu0 0
      %1870 = vmatpush1.bf16.msra.mxu0 0
      %1871 = vmatprep.subr.bf16.mxu0 0
      %1872 = vmatpush1.bf16.msra.mxu0 0
      %1873 = vmatprep.subr.bf16.mxu0 0
      %1874 = vmatpush1.bf16.msra.mxu0 0
      %1875 = vmatprep.subr.bf16.mxu0 0
      %1876 = vmatpush1.bf16.msra.mxu0 0
      %1877 = vmatprep.subr.bf16.mxu0 0
      %1878 = vmatpush1.bf16.msra.mxu0 0
      %1879 = vmatprep.subr.bf16.mxu0 0
      %1880 = vmatpush1.bf16.msra.mxu0 0
      %1881 = vmatprep.subr.bf16.mxu0 0
      %1882 = vmatpush1.bf16.msra.mxu0 0
      %1883 = vmatprep.subr.bf16.mxu0 0
      %1884 = vmatpush1.bf16.msra.mxu0 0
      %1885 = vmatprep.subr.bf16.mxu0 0
      %1886 = vmatpush1.bf16.msra.mxu0 0
      %1887 = vmatprep.subr.bf16.mxu0 0
      %1888 = vmatpush1.bf16.msra.mxu0 0
      %1889 = vmatprep.subr.bf16.mxu0 0
      %1890 = vmatpush1.bf16.msra.mxu0 0
      %1891 = vmatprep.mubr.bf16.mxu0 0
      %1892 = vmatmul.mubr.bf16.gmra.mrb[0].mxu0 %v1848
      %v1893 = vpop.f32.mrb[0].mxu0
      %v1894 = vadd.f32 0.0, %v1893
      %v1895 = vpop.f32.mrb[0].mxu0
      %v1896 = vadd.f32 0.0, %v1895
      %v1897 = vpop.f32.mrb[0].mxu0
      %v1898 = vpop.f32.mrb[0].mxu0
      %1899 = vdwg.mxu0
      %1900 = vmatprep.subr.bf16.mxu0 0
      %1901 = vmatpush1.bf16.msra.mxu0 %v1857
      %1902 = vmatprep.subr.bf16.mxu0 0
      %1903 = vmatpush1.bf16.msra.mxu0 0
      %1904 = vmatprep.subr.bf16.mxu0 0
      %1905 = vmatpush1.bf16.msra.mxu0 0
      %1906 = vmatprep.subr.bf16.mxu0 0
      %1907 = vmatpush1.bf16.msra.mxu0 0
      %1908 = vmatprep.subr.bf16.mxu0 0
      %1909 = vmatpush1.bf16.msra.mxu0 0
      %1910 = vmatprep.subr.bf16.mxu0 0
      %1911 = vmatpush1.bf16.msra.mxu0 0
      %1912 = vmatprep.subr.bf16.mxu0 0
      %1913 = vmatpush1.bf16.msra.mxu0 0
      %1914 = vmatprep.subr.bf16.mxu0 0
      %1915 = vmatpush1.bf16.msra.mxu0 0
      %1916 = vmatprep.subr.bf16.mxu0 0
      %1917 = vmatpush1.bf16.msra.mxu0 0
      %1918 = vmatprep.subr.bf16.mxu0 0
      %1919 = vmatpush1.bf16.msra.mxu0 0
      %1920 = vmatprep.subr.bf16.mxu0 0
      %1921 = vmatpush1.bf16.msra.mxu0 0
      %1922 = vmatprep.subr.bf16.mxu0 0
      %1923 = vmatpush1.bf16.msra.mxu0 0
      %1924 = vmatprep.subr.bf16.mxu0 0
      %1925 = vmatpush1.bf16.msra.mxu0 0
      %1926 = vmatprep.subr.bf16.mxu0 0
      %1927 = vmatpush1.bf16.msra.mxu0 0
      %1928 = vmatprep.subr.bf16.mxu0 0
      %1929 = vmatpush1.bf16.msra.mxu0 0
      %1930 = vmatprep.subr.bf16.mxu0 0
      %1931 = vmatpush1.bf16.msra.mxu0 0
      %1932 = vmatprep.mubr.bf16.mxu0 0
      %1933 = vmatmul.mubr.bf16.gmra.mrb[0].mxu0 %v1848
      %v1934 = vpop.f32.mrb[0].mxu0
      %v1935 = vadd.f32 0.0, %v1934
      %v1936 = vpop.f32.mrb[0].mxu0
      %v1937 = vpop.f32.mrb[0].mxu0
      %v1938 = vpop.f32.mrb[0].mxu0
      %1939 = vdwg.mxu0
      %v1940 = vadd.f32 %v1834, %v1894
      %v1941 = vadd.f32 %v1835, %v1896
      %v1942 = vadd.f32 %v1836, %v1935
      %s1943 = scalar_lea.vmem %s5, 16
      %v1944 = vld [vmem:[%s1943] sm:$0xf]
      %1945 = vrot.lane.b32.xlu0 %v1530, 109
      %v1946 = vpop.permute.xlu0 %1945
      %1947 = vrot.lane.b32.xlu0 %v1525, 109
      %v1948 = vpop.permute.xlu0 %1947
      %1949 = vrot.lane.b32.xlu0 %v1533, 109
      %v1950 = vpop.permute.xlu0 %1949
      %v1951 = vsel %vm953, %v1946, %v1948
      %v1952 = vsel %vm953, %v1948, %v1950
      %v1954 = vsel %vm546, %v1944, 0
      %v1957 = vsel %vm550, %v1951, 0
      %v1960 = vsel %vm550, %v1952, 0
      %v1963 = vsel %vm550, %v1950, 0
      %1965 = vmatprep.subr.bf16.mxu0 %v1960
      %1966 = vmatpush1.bf16.msra.mxu0 %v1957
      %1967 = vmatprep.subr.bf16.mxu0 0
      %1968 = vmatpush1.bf16.msra.mxu0 0
      %1969 = vmatprep.subr.bf16.mxu0 0
      %1970 = vmatpush1.bf16.msra.mxu0 0
      %1971 = vmatprep.subr.bf16.mxu0 0
      %1972 = vmatpush1.bf16.msra.mxu0 0
      %1973 = vmatprep.subr.bf16.mxu0 0
      %1974 = vmatpush1.bf16.msra.mxu0 0
      %1975 = vmatprep.subr.bf16.mxu0 0
      %1976 = vmatpush1.bf16.msra.mxu0 0
      %1977 = vmatprep.subr.bf16.mxu0 0
      %1978 = vmatpush1.bf16.msra.mxu0 0
      %1979 = vmatprep.subr.bf16.mxu0 0
      %1980 = vmatpush1.bf16.msra.mxu0 0
      %1981 = vmatprep.subr.bf16.mxu0 0
      %1982 = vmatpush1.bf16.msra.mxu0 0
      %1983 = vmatprep.subr.bf16.mxu0 0
      %1984 = vmatpush1.bf16.msra.mxu0 0
      %1985 = vmatprep.subr.bf16.mxu0 0
      %1986 = vmatpush1.bf16.msra.mxu0 0
      %1987 = vmatprep.subr.bf16.mxu0 0
      %1988 = vmatpush1.bf16.msra.mxu0 0
      %1989 = vmatprep.subr.bf16.mxu0 0
      %1990 = vmatpush1.bf16.msra.mxu0 0
      %1991 = vmatprep.subr.bf16.mxu0 0
      %1992 = vmatpush1.bf16.msra.mxu0 0
      %1993 = vmatprep.subr.bf16.mxu0 0
      %1994 = vmatpush1.bf16.msra.mxu0 0
      %1995 = vmatprep.subr.bf16.mxu0 0
      %1996 = vmatpush1.bf16.msra.mxu0 0
      %1997 = vmatprep.mubr.bf16.mxu0 0
      %1998 = vmatmul.mubr.bf16.gmra.mrb[0].mxu0 %v1954
      %v1999 = vpop.f32.mrb[0].mxu0
      %v2000 = vadd.f32 0.0, %v1999
      %v2001 = vpop.f32.mrb[0].mxu0
      %v2002 = vadd.f32 0.0, %v2001
      %v2003 = vpop.f32.mrb[0].mxu0
      %v2004 = vpop.f32.mrb[0].mxu0
      %2005 = vdwg.mxu0
      %2006 = vmatprep.subr.bf16.mxu0 0
      %2007 = vmatpush1.bf16.msra.mxu0 %v1963
      %2008 = vmatprep.subr.bf16.mxu0 0
      %2009 = vmatpush1.bf16.msra.mxu0 0
      %2010 = vmatprep.subr.bf16.mxu0 0
      %2011 = vmatpush1.bf16.msra.mxu0 0
      %2012 = vmatprep.subr.bf16.mxu0 0
      %2013 = vmatpush1.bf16.msra.mxu0 0
      %2014 = vmatprep.subr.bf16.mxu0 0
      %2015 = vmatpush1.bf16.msra.mxu0 0
      %2016 = vmatprep.subr.bf16.mxu0 0
      %2017 = vmatpush1.bf16.msra.mxu0 0
      %2018 = vmatprep.subr.bf16.mxu0 0
      %2019 = vmatpush1.bf16.msra.mxu0 0
      %2020 = vmatprep.subr.bf16.mxu0 0
      %2021 = vmatpush1.bf16.msra.mxu0 0
      %2022 = vmatprep.subr.bf16.mxu0 0
      %2023 = vmatpush1.bf16.msra.mxu0 0
      %2024 = vmatprep.subr.bf16.mxu0 0
      %2025 = vmatpush1.bf16.msra.mxu0 0
      %2026 = vmatprep.subr.bf16.mxu0 0
      %2027 = vmatpush1.bf16.msra.mxu0 0
      %2028 = vmatprep.subr.bf16.mxu0 0
      %2029 = vmatpush1.bf16.msra.mxu0 0
      %2030 = vmatprep.subr.bf16.mxu0 0
      %2031 = vmatpush1.bf16.msra.mxu0 0
      %2032 = vmatprep.subr.bf16.mxu0 0
      %2033 = vmatpush1.bf16.msra.mxu0 0
      %2034 = vmatprep.subr.bf16.mxu0 0
      %2035 = vmatpush1.bf16.msra.mxu0 0
      %2036 = vmatprep.subr.bf16.mxu0 0
      %2037 = vmatpush1.bf16.msra.mxu0 0
      %2038 = vmatprep.mubr.bf16.mxu0 0
      %2039 = vmatmul.mubr.bf16.gmra.mrb[0].mxu0 %v1954
      %v2040 = vpop.f32.mrb[0].mxu0
      %v2041 = vadd.f32 0.0, %v2040
      %v2042 = vpop.f32.mrb[0].mxu0
      %v2043 = vpop.f32.mrb[0].mxu0
      %v2044 = vpop.f32.mrb[0].mxu0
      %2045 = vdwg.mxu0
      %v2046 = vadd.f32 %v1940, %v2000
      %v2047 = vadd.f32 %v1941, %v2002
      %v2048 = vadd.f32 %v1942, %v2041
      %s2049 = scalar_lea.vmem %s5, 20
      %v2050 = vld [vmem:[%s2049] sm:$0xf]
      %2051 = vrot.lane.b32.xlu0 %v1530, 108
      %v2052 = vpop.permute.xlu0 %2051
      %2053 = vrot.lane.b32.xlu0 %v1525, 108
      %v2054 = vpop.permute.xlu0 %2053
      %2055 = vrot.lane.b32.xlu0 %v1533, 108
      %v2056 = vpop.permute.xlu0 %2055
      %v2057 = vsel %vm1060, %v2052, %v2054
      %v2058 = vsel %vm1060, %v2054, %v2056
      %v2060 = vsel %vm546, %v2050, 0
      %v2063 = vsel %vm550, %v2057, 0
      %v2066 = vsel %vm550, %v2058, 0
      %v2069 = vsel %vm550, %v2056, 0
      %2071 = vmatprep.subr.bf16.mxu0 %v2066
      %2072 = vmatpush1.bf16.msra.mxu0 %v2063
      %2073 = vmatprep.subr.bf16.mxu0 0
      %2074 = vmatpush1.bf16.msra.mxu0 0
      %2075 = vmatprep.subr.bf16.mxu0 0
      %2076 = vmatpush1.bf16.msra.mxu0 0
      %2077 = vmatprep.subr.bf16.mxu0 0
      %2078 = vmatpush1.bf16.msra.mxu0 0
      %2079 = vmatprep.subr.bf16.mxu0 0
      %2080 = vmatpush1.bf16.msra.mxu0 0
      %2081 = vmatprep.subr.bf16.mxu0 0
      %2082 = vmatpush1.bf16.msra.mxu0 0
      %2083 = vmatprep.subr.bf16.mxu0 0
      %2084 = vmatpush1.bf16.msra.mxu0 0
      %2085 = vmatprep.subr.bf16.mxu0 0
      %2086 = vmatpush1.bf16.msra.mxu0 0
      %2087 = vmatprep.subr.bf16.mxu0 0
      %2088 = vmatpush1.bf16.msra.mxu0 0
      %2089 = vmatprep.subr.bf16.mxu0 0
      %2090 = vmatpush1.bf16.msra.mxu0 0
      %2091 = vmatprep.subr.bf16.mxu0 0
      %2092 = vmatpush1.bf16.msra.mxu0 0
      %2093 = vmatprep.subr.bf16.mxu0 0
      %2094 = vmatpush1.bf16.msra.mxu0 0
      %2095 = vmatprep.subr.bf16.mxu0 0
      %2096 = vmatpush1.bf16.msra.mxu0 0
      %2097 = vmatprep.subr.bf16.mxu0 0
      %2098 = vmatpush1.bf16.msra.mxu0 0
      %2099 = vmatprep.subr.bf16.mxu0 0
      %2100 = vmatpush1.bf16.msra.mxu0 0
      %2101 = vmatprep.subr.bf16.mxu0 0
      %2102 = vmatpush1.bf16.msra.mxu0 0
      %2103 = vmatprep.mubr.bf16.mxu0 0
      %2104 = vmatmul.mubr.bf16.gmra.mrb[0].mxu0 %v2060
      %v2105 = vpop.f32.mrb[0].mxu0
      %v2106 = vadd.f32 0.0, %v2105
      %v2107 = vpop.f32.mrb[0].mxu0
      %v2108 = vadd.f32 0.0, %v2107
      %v2109 = vpop.f32.mrb[0].mxu0
      %v2110 = vpop.f32.mrb[0].mxu0
      %2111 = vdwg.mxu0
      %2112 = vmatprep.subr.bf16.mxu0 0
      %2113 = vmatpush1.bf16.msra.mxu0 %v2069
      %2114 = vmatprep.subr.bf16.mxu0 0
      %2115 = vmatpush1.bf16.msra.mxu0 0
      %2116 = vmatprep.subr.bf16.mxu0 0
      %2117 = vmatpush1.bf16.msra.mxu0 0
      %2118 = vmatprep.subr.bf16.mxu0 0
      %2119 = vmatpush1.bf16.msra.mxu0 0
      %2120 = vmatprep.subr.bf16.mxu0 0
      %2121 = vmatpush1.bf16.msra.mxu0 0
      %2122 = vmatprep.subr.bf16.mxu0 0
      %2123 = vmatpush1.bf16.msra.mxu0 0
      %2124 = vmatprep.subr.bf16.mxu0 0
      %2125 = vmatpush1.bf16.msra.mxu0 0
      %2126 = vmatprep.subr.bf16.mxu0 0
      %2127 = vmatpush1.bf16.msra.mxu0 0
      %2128 = vmatprep.subr.bf16.mxu0 0
      %2129 = vmatpush1.bf16.msra.mxu0 0
      %2130 = vmatprep.subr.bf16.mxu0 0
      %2131 = vmatpush1.bf16.msra.mxu0 0
      %2132 = vmatprep.subr.bf16.mxu0 0
      %2133 = vmatpush1.bf16.msra.mxu0 0
      %2134 = vmatprep.subr.bf16.mxu0 0
      %2135 = vmatpush1.bf16.msra.mxu0 0
      %2136 = vmatprep.subr.bf16.mxu0 0
      %2137 = vmatpush1.bf16.msra.mxu0 0
      %2138 = vmatprep.subr.bf16.mxu0 0
      %2139 = vmatpush1.bf16.msra.mxu0 0
      %2140 = vmatprep.subr.bf16.mxu0 0
      %2141 = vmatpush1.bf16.msra.mxu0 0
      %2142 = vmatprep.subr.bf16.mxu0 0
      %2143 = vmatpush1.bf16.msra.mxu0 0
      %2144 = vmatprep.mubr.bf16.mxu0 0
      %2145 = vmatmul.mubr.bf16.gmra.mrb[0].mxu0 %v2060
      %v2146 = vpop.f32.mrb[0].mxu0
      %v2147 = vadd.f32 0.0, %v2146
      %v2148 = vpop.f32.mrb[0].mxu0
      %v2149 = vpop.f32.mrb[0].mxu0
      %v2150 = vpop.f32.mrb[0].mxu0
      %2151 = vdwg.mxu0
      %v2152 = vadd.f32 %v2046, %v2106
      %v2153 = vadd.f32 %v2047, %v2108
      %v2154 = vadd.f32 %v2048, %v2147
      %s2155 = scalar_lea.vmem %s5, 24
      %v2156 = vld [vmem:[%s2155] sm:$0xf]
      %2157 = vrot.lane.b32.xlu0 %v1530, 92
      %v2158 = vpop.permute.xlu0 %2157
      %2159 = vrot.lane.b32.xlu0 %v1525, 92
      %v2160 = vpop.permute.xlu0 %2159
      %2161 = vrot.lane.b32.xlu0 %v1533, 92
      %v2162 = vpop.permute.xlu0 %2161
      %v2163 = vsel %vm1167, %v2158, %v2160
      %v2164 = vsel %vm1167, %v2160, %v2162
      %v2166 = vsel %vm546, %v2156, 0
      %v2169 = vsel %vm550, %v2163, 0
      %v2172 = vsel %vm550, %v2164, 0
      %v2175 = vsel %vm550, %v2162, 0
      %2177 = vmatprep.subr.bf16.mxu0 %v2172
      %2178 = vmatpush1.bf16.msra.mxu0 %v2169
      %2179 = vmatprep.subr.bf16.mxu0 0
      %2180 = vmatpush1.bf16.msra.mxu0 0
      %2181 = vmatprep.subr.bf16.mxu0 0
      %2182 = vmatpush1.bf16.msra.mxu0 0
      %2183 = vmatprep.subr.bf16.mxu0 0
      %2184 = vmatpush1.bf16.msra.mxu0 0
      %2185 = vmatprep.subr.bf16.mxu0 0
      %2186 = vmatpush1.bf16.msra.mxu0 0
      %2187 = vmatprep.subr.bf16.mxu0 0
      %2188 = vmatpush1.bf16.msra.mxu0 0
      %2189 = vmatprep.subr.bf16.mxu0 0
      %2190 = vmatpush1.bf16.msra.mxu0 0
      %2191 = vmatprep.subr.bf16.mxu0 0
      %2192 = vmatpush1.bf16.msra.mxu0 0
      %2193 = vmatprep.subr.bf16.mxu0 0
      %2194 = vmatpush1.bf16.msra.mxu0 0
      %2195 = vmatprep.subr.bf16.mxu0 0
      %2196 = vmatpush1.bf16.msra.mxu0 0
      %2197 = vmatprep.subr.bf16.mxu0 0
      %2198 = vmatpush1.bf16.msra.mxu0 0
      %2199 = vmatprep.subr.bf16.mxu0 0
      %2200 = vmatpush1.bf16.msra.mxu0 0
      %2201 = vmatprep.subr.bf16.mxu0 0
      %2202 = vmatpush1.bf16.msra.mxu0 0
      %2203 = vmatprep.subr.bf16.mxu0 0
      %2204 = vmatpush1.bf16.msra.mxu0 0
      %2205 = vmatprep.subr.bf16.mxu0 0
      %2206 = vmatpush1.bf16.msra.mxu0 0
      %2207 = vmatprep.subr.bf16.mxu0 0
      %2208 = vmatpush1.bf16.msra.mxu0 0
      %2209 = vmatprep.mubr.bf16.mxu0 0
      %2210 = vmatmul.mubr.bf16.gmra.mrb[0].mxu0 %v2166
      %v2211 = vpop.f32.mrb[0].mxu0
      %v2212 = vadd.f32 0.0, %v2211
      %v2213 = vpop.f32.mrb[0].mxu0
      %v2214 = vadd.f32 0.0, %v2213
      %v2215 = vpop.f32.mrb[0].mxu0
      %v2216 = vpop.f32.mrb[0].mxu0
      %2217 = vdwg.mxu0
      %2218 = vmatprep.subr.bf16.mxu0 0
      %2219 = vmatpush1.bf16.msra.mxu0 %v2175
      %2220 = vmatprep.subr.bf16.mxu0 0
      %2221 = vmatpush1.bf16.msra.mxu0 0
      %2222 = vmatprep.subr.bf16.mxu0 0
      %2223 = vmatpush1.bf16.msra.mxu0 0
      %2224 = vmatprep.subr.bf16.mxu0 0
      %2225 = vmatpush1.bf16.msra.mxu0 0
      %2226 = vmatprep.subr.bf16.mxu0 0
      %2227 = vmatpush1.bf16.msra.mxu0 0
      %2228 = vmatprep.subr.bf16.mxu0 0
      %2229 = vmatpush1.bf16.msra.mxu0 0
      %2230 = vmatprep.subr.bf16.mxu0 0
      %2231 = vmatpush1.bf16.msra.mxu0 0
      %2232 = vmatprep.subr.bf16.mxu0 0
      %2233 = vmatpush1.bf16.msra.mxu0 0
      %2234 = vmatprep.subr.bf16.mxu0 0
      %2235 = vmatpush1.bf16.msra.mxu0 0
      %2236 = vmatprep.subr.bf16.mxu0 0
      %2237 = vmatpush1.bf16.msra.mxu0 0
      %2238 = vmatprep.subr.bf16.mxu0 0
      %2239 = vmatpush1.bf16.msra.mxu0 0
      %2240 = vmatprep.subr.bf16.mxu0 0
      %2241 = vmatpush1.bf16.msra.mxu0 0
      %2242 = vmatprep.subr.bf16.mxu0 0
      %2243 = vmatpush1.bf16.msra.mxu0 0
      %2244 = vmatprep.subr.bf16.mxu0 0
      %2245 = vmatpush1.bf16.msra.mxu0 0
      %2246 = vmatprep.subr.bf16.mxu0 0
      %2247 = vmatpush1.bf16.msra.mxu0 0
      %2248 = vmatprep.subr.bf16.mxu0 0
      %2249 = vmatpush1.bf16.msra.mxu0 0
      %2250 = vmatprep.mubr.bf16.mxu0 0
      %2251 = vmatmul.mubr.bf16.gmra.mrb[0].mxu0 %v2166
      %v2252 = vpop.f32.mrb[0].mxu0
      %v2253 = vadd.f32 0.0, %v2252
      %v2254 = vpop.f32.mrb[0].mxu0
      %v2255 = vpop.f32.mrb[0].mxu0
      %v2256 = vpop.f32.mrb[0].mxu0
      %2257 = vdwg.mxu0
      %v2258 = vadd.f32 %v2152, %v2212
      %v2259 = vadd.f32 %v2153, %v2214
      %v2260 = vadd.f32 %v2154, %v2253
      %s2261 = scalar_lea.vmem %s5, 28
      %v2262 = vld [vmem:[%s2261] sm:$0xf]
      %2263 = vrot.lane.b32.xlu0 %v1530, 91
      %v2264 = vpop.permute.xlu0 %2263
      %2265 = vrot.lane.b32.xlu0 %v1525, 91
      %v2266 = vpop.permute.xlu0 %2265
      %2267 = vrot.lane.b32.xlu0 %v1533, 91
      %v2268 = vpop.permute.xlu0 %2267
      %v2269 = vsel %vm1274, %v2264, %v2266
      %v2270 = vsel %vm1274, %v2266, %v2268
      %v2272 = vsel %vm546, %v2262, 0
      %v2275 = vsel %vm550, %v2269, 0
      %v2278 = vsel %vm550, %v2270, 0
      %v2281 = vsel %vm550, %v2268, 0
      %2283 = vmatprep.subr.bf16.mxu0 %v2278
      %2284 = vmatpush1.bf16.msra.mxu0 %v2275
      %2285 = vmatprep.subr.bf16.mxu0 0
      %2286 = vmatpush1.bf16.msra.mxu0 0
      %2287 = vmatprep.subr.bf16.mxu0 0
      %2288 = vmatpush1.bf16.msra.mxu0 0
      %2289 = vmatprep.subr.bf16.mxu0 0
      %2290 = vmatpush1.bf16.msra.mxu0 0
      %2291 = vmatprep.subr.bf16.mxu0 0
      %2292 = vmatpush1.bf16.msra.mxu0 0
      %2293 = vmatprep.subr.bf16.mxu0 0
      %2294 = vmatpush1.bf16.msra.mxu0 0
      %2295 = vmatprep.subr.bf16.mxu0 0
      %2296 = vmatpush1.bf16.msra.mxu0 0
      %2297 = vmatprep.subr.bf16.mxu0 0
      %2298 = vmatpush1.bf16.msra.mxu0 0
      %2299 = vmatprep.subr.bf16.mxu0 0
      %2300 = vmatpush1.bf16.msra.mxu0 0
      %2301 = vmatprep.subr.bf16.mxu0 0
      %2302 = vmatpush1.bf16.msra.mxu0 0
      %2303 = vmatprep.subr.bf16.mxu0 0
      %2304 = vmatpush1.bf16.msra.mxu0 0
      %2305 = vmatprep.subr.bf16.mxu0 0
      %2306 = vmatpush1.bf16.msra.mxu0 0
      %2307 = vmatprep.subr.bf16.mxu0 0
      %2308 = vmatpush1.bf16.msra.mxu0 0
      %2309 = vmatprep.subr.bf16.mxu0 0
      %2310 = vmatpush1.bf16.msra.mxu0 0
      %2311 = vmatprep.subr.bf16.mxu0 0
      %2312 = vmatpush1.bf16.msra.mxu0 0
      %2313 = vmatprep.subr.bf16.mxu0 0
      %2314 = vmatpush1.bf16.msra.mxu0 0
      %2315 = vmatprep.mubr.bf16.mxu0 0
      %2316 = vmatmul.mubr.bf16.gmra.mrb[0].mxu0 %v2272
      %v2317 = vpop.f32.mrb[0].mxu0
      %v2318 = vadd.f32 0.0, %v2317
      %v2319 = vpop.f32.mrb[0].mxu0
      %v2320 = vadd.f32 0.0, %v2319
      %v2321 = vpop.f32.mrb[0].mxu0
      %v2322 = vpop.f32.mrb[0].mxu0
      %2323 = vdwg.mxu0
      %2324 = vmatprep.subr.bf16.mxu0 0
      %2325 = vmatpush1.bf16.msra.mxu0 %v2281
      %2326 = vmatprep.subr.bf16.mxu0 0
      %2327 = vmatpush1.bf16.msra.mxu0 0
      %2328 = vmatprep.subr.bf16.mxu0 0
      %2329 = vmatpush1.bf16.msra.mxu0 0
      %2330 = vmatprep.subr.bf16.mxu0 0
      %2331 = vmatpush1.bf16.msra.mxu0 0
      %2332 = vmatprep.subr.bf16.mxu0 0
      %2333 = vmatpush1.bf16.msra.mxu0 0
      %2334 = vmatprep.subr.bf16.mxu0 0
      %2335 = vmatpush1.bf16.msra.mxu0 0
      %2336 = vmatprep.subr.bf16.mxu0 0
      %2337 = vmatpush1.bf16.msra.mxu0 0
      %2338 = vmatprep.subr.bf16.mxu0 0
      %2339 = vmatpush1.bf16.msra.mxu0 0
      %2340 = vmatprep.subr.bf16.mxu0 0
      %2341 = vmatpush1.bf16.msra.mxu0 0
      %2342 = vmatprep.subr.bf16.mxu0 0
      %2343 = vmatpush1.bf16.msra.mxu0 0
      %2344 = vmatprep.subr.bf16.mxu0 0
      %2345 = vmatpush1.bf16.msra.mxu0 0
      %2346 = vmatprep.subr.bf16.mxu0 0
      %2347 = vmatpush1.bf16.msra.mxu0 0
      %2348 = vmatprep.subr.bf16.mxu0 0
      %2349 = vmatpush1.bf16.msra.mxu0 0
      %2350 = vmatprep.subr.bf16.mxu0 0
      %2351 = vmatpush1.bf16.msra.mxu0 0
      %2352 = vmatprep.subr.bf16.mxu0 0
      %2353 = vmatpush1.bf16.msra.mxu0 0
      %2354 = vmatprep.subr.bf16.mxu0 0
      %2355 = vmatpush1.bf16.msra.mxu0 0
      %2356 = vmatprep.mubr.bf16.mxu0 0
      %2357 = vmatmul.mubr.bf16.gmra.mrb[0].mxu0 %v2272
      %v2358 = vpop.f32.mrb[0].mxu0
      %v2359 = vadd.f32 0.0, %v2358
      %v2360 = vpop.f32.mrb[0].mxu0
      %v2361 = vpop.f32.mrb[0].mxu0
      %v2362 = vpop.f32.mrb[0].mxu0
      %2363 = vdwg.mxu0
      %v2364 = vadd.f32 %v2258, %v2318
      %v2365 = vadd.f32 %v2259, %v2320
      %v2366 = vadd.f32 %v2260, %v2359
      %s2367 = scalar_lea.vmem %s5, 32
      %v2368 = vld [vmem:[%s2367] sm:$0xf]
      %2369 = vrot.lane.b32.xlu0 %v1530, 90
      %v2370 = vpop.permute.xlu0 %2369
      %2371 = vrot.lane.b32.xlu0 %v1525, 90
      %v2372 = vpop.permute.xlu0 %2371
      %2373 = vrot.lane.b32.xlu0 %v1533, 90
      %v2374 = vpop.permute.xlu0 %2373
      %v2375 = vsel %vm1381, %v2370, %v2372
      %v2376 = vsel %vm1381, %v2372, %v2374
      %v2378 = vsel %vm546, %v2368, 0
      %v2381 = vsel %vm550, %v2375, 0
      %v2384 = vsel %vm550, %v2376, 0
      %v2387 = vsel %vm550, %v2374, 0
      %2389 = vmatprep.subr.bf16.mxu0 %v2384
      %2390 = vmatpush1.bf16.msra.mxu0 %v2381
      %2391 = vmatprep.subr.bf16.mxu0 0
      %2392 = vmatpush1.bf16.msra.mxu0 0
      %2393 = vmatprep.subr.bf16.mxu0 0
      %2394 = vmatpush1.bf16.msra.mxu0 0
      %2395 = vmatprep.subr.bf16.mxu0 0
      %2396 = vmatpush1.bf16.msra.mxu0 0
      %2397 = vmatprep.subr.bf16.mxu0 0
      %2398 = vmatpush1.bf16.msra.mxu0 0
      %2399 = vmatprep.subr.bf16.mxu0 0
      %2400 = vmatpush1.bf16.msra.mxu0 0
      %2401 = vmatprep.subr.bf16.mxu0 0
      %2402 = vmatpush1.bf16.msra.mxu0 0
      %2403 = vmatprep.subr.bf16.mxu0 0
      %2404 = vmatpush1.bf16.msra.mxu0 0
      %2405 = vmatprep.subr.bf16.mxu0 0
      %2406 = vmatpush1.bf16.msra.mxu0 0
      %2407 = vmatprep.subr.bf16.mxu0 0
      %2408 = vmatpush1.bf16.msra.mxu0 0
      %2409 = vmatprep.subr.bf16.mxu0 0
      %2410 = vmatpush1.bf16.msra.mxu0 0
      %2411 = vmatprep.subr.bf16.mxu0 0
      %2412 = vmatpush1.bf16.msra.mxu0 0
      %2413 = vmatprep.subr.bf16.mxu0 0
      %2414 = vmatpush1.bf16.msra.mxu0 0
      %2415 = vmatprep.subr.bf16.mxu0 0
      %2416 = vmatpush1.bf16.msra.mxu0 0
      %2417 = vmatprep.subr.bf16.mxu0 0
      %2418 = vmatpush1.bf16.msra.mxu0 0
      %2419 = vmatprep.subr.bf16.mxu0 0
      %2420 = vmatpush1.bf16.msra.mxu0 0
      %2421 = vmatprep.mubr.bf16.mxu0 0
      %2422 = vmatmul.mubr.bf16.gmra.mrb[0].mxu0 %v2378
      %v2423 = vpop.f32.mrb[0].mxu0
      %v2424 = vadd.f32 0.0, %v2423
      %v2425 = vpop.f32.mrb[0].mxu0
      %v2426 = vadd.f32 0.0, %v2425
      %v2427 = vpop.f32.mrb[0].mxu0
      %v2428 = vpop.f32.mrb[0].mxu0
      %2429 = vdwg.mxu0
      %2430 = vmatprep.subr.bf16.mxu0 0
      %2431 = vmatpush1.bf16.msra.mxu0 %v2387
      %2432 = vmatprep.subr.bf16.mxu0 0
      %2433 = vmatpush1.bf16.msra.mxu0 0
      %2434 = vmatprep.subr.bf16.mxu0 0
      %2435 = vmatpush1.bf16.msra.mxu0 0
      %2436 = vmatprep.subr.bf16.mxu0 0
      %2437 = vmatpush1.bf16.msra.mxu0 0
      %2438 = vmatprep.subr.bf16.mxu0 0
      %2439 = vmatpush1.bf16.msra.mxu0 0
      %2440 = vmatprep.subr.bf16.mxu0 0
      %2441 = vmatpush1.bf16.msra.mxu0 0
      %2442 = vmatprep.subr.bf16.mxu0 0
      %2443 = vmatpush1.bf16.msra.mxu0 0
      %2444 = vmatprep.subr.bf16.mxu0 0
      %2445 = vmatpush1.bf16.msra.mxu0 0
      %2446 = vmatprep.subr.bf16.mxu0 0
      %2447 = vmatpush1.bf16.msra.mxu0 0
      %2448 = vmatprep.subr.bf16.mxu0 0
      %2449 = vmatpush1.bf16.msra.mxu0 0
      %2450 = vmatprep.subr.bf16.mxu0 0
      %2451 = vmatpush1.bf16.msra.mxu0 0
      %2452 = vmatprep.subr.bf16.mxu0 0
      %2453 = vmatpush1.bf16.msra.mxu0 0
      %2454 = vmatprep.subr.bf16.mxu0 0
      %2455 = vmatpush1.bf16.msra.mxu0 0
      %2456 = vmatprep.subr.bf16.mxu0 0
      %2457 = vmatpush1.bf16.msra.mxu0 0
      %2458 = vmatprep.subr.bf16.mxu0 0
      %2459 = vmatpush1.bf16.msra.mxu0 0
      %2460 = vmatprep.subr.bf16.mxu0 0
      %2461 = vmatpush1.bf16.msra.mxu0 0
      %2462 = vmatprep.mubr.bf16.mxu0 0
      %2463 = vmatmul.mubr.bf16.gmra.mrb[0].mxu0 %v2378
      %v2464 = vpop.f32.mrb[0].mxu0
      %v2465 = vadd.f32 0.0, %v2464
      %v2466 = vpop.f32.mrb[0].mxu0
      %v2467 = vpop.f32.mrb[0].mxu0
      %v2468 = vpop.f32.mrb[0].mxu0
      %2469 = vdwg.mxu0
      %v2470 = vadd.f32 %v2364, %v2424
      %v2471 = vadd.f32 %v2365, %v2426
      %v2472 = vadd.f32 %v2366, %v2465
      %v2473 = vld [vmem:[%s6] sm:$0xff]
      %2475 = vset.pattern.permute.xlu0 0
      %2476 = vperm.xlu0 %2475, %v2473
      %v2477 = vpop.permute.xlu0 %2476
      %v2479 = vadd.f32 %v2470, %v2477
      %v2480 = vadd.f32 %v2471, %v2477
      %v2481 = vadd.f32 %v2472, %v2477
      %v2482 = vmax.f32 %v2479, 0.0
      %v2483 = vmax.f32 %v2480, 0.0
      %v2484 = vmax.f32 %v2481, 0.0
      %v2485 = vpack.c.bf16 %v2482, %v2482
      %v2486 = vpack.c.bf16 %v2483, %v2483
      %v2487 = vpack.c.bf16 %v2484, %v2484
      %v2491 = vunpack.c.l.b16 %v2485
      %v2492 = vunpack.c.l.b16 %v2486
      %v2493 = vunpack.c.l.b16 %v2487
      %v2494 = vpack.c.b16 %v2492, %v2491
      %v2495 = vpack.c.b16 %v2493, %v2493
      %2498 = vst [vmem:[%s322] sm:$0xff] %v2494
      %vm2499 = vcmask 257024
      %2500 = vst.msk [vmem:[%s322 + $0x8] sm:$0xf] %vm2499, %v2495
      %p2501 = scmp.lt.s32.totalorder %s19, 1
      %s2502 = scalar_select %p2501, %s19, 1
      %s2503 = smul.addr %s2502, 3
      %s2504 = smul.addr %s2503, 4
      %s2505 = scalar_lea.vmem %s8, %s2504
      // Predicated region
      $region53: #{up_pallas.1} parent=51 // pred_check
        %p2506 = pneg %p215
      $region54: #{up_pallas.1} parent=51 // pred_check_branch
        %2508 = sbr.rel (%p2506) target = $region56
      $region55: #{up_pallas.1} parent=51 // pred_region
        _
      $region56: #{up_pallas.1} parent=51 // pred_fallthru
        _
    $region52: #{up_pallas.1} parent=5 // pred_fallthru
      _
    %p2509 = scmp.le.s32.totalorder 2, %s14
    // Predicated region
    $region57: #{up_pallas.1} parent=5 // pred_check
      %p2510 = pneg %p2509
    $region58: #{up_pallas.1} parent=5 // pred_check_branch
      %2512 = sbr.rel (%p2510) target = $region60
    $region59: #{up_pallas.1} parent=5 // pred_region
      %s2513 = ssub.s32 %s14, 2
      // Predicated region
      $region61: #{up_pallas.1} parent=59 // pred_check
        %p2514 = pneg %p221
      $region62: #{up_pallas.1} parent=59 // pred_check_branch
        %2516 = sbr.rel (%p2514) target = $region64
      $region63: #{up_pallas.1} parent=59 // pred_region
        %p2517 = scmp.lt.s32.totalorder %s20, 1
        %s2518 = scalar_select %p2517, %s20, 1
        %s2519 = smul.addr %s2518, 3
        %s2520 = smul.addr %s2519, 4
        %s2521 = scalar_lea.vmem %s8, %s2520
      $region64: #{up_pallas.1} parent=59 // pred_fallthru
        _
    $region60: #{up_pallas.1} parent=5 // pred_fallthru
      _
  $region6: #{up_pallas.1} parent=0 // loop_footer
    %s18 = sadd.s32 1, %s14
  $region7: #{up_pallas.1} parent=0 // loop_footer_branch
    %13 = sbr.rel target = $region3
  $region8: #{up_pallas.1} parent=0 // loop_exit
    _

</llo_original>
